<compile_context>
chip_gen: v6e
topology: v6e:2x2x1
jax: 0.10.0
libtpu: 0.0.40
codegen_flags: <defaults>
</compile_context>

<pallas_src>
import functools
import math

import numpy as np
import jax
import jax.numpy as jnp
from jax import lax
from jax.experimental import pallas as pl
from jax.experimental.pallas import tpu as pltpu

_LANE = 128
_VMEM_LIMIT = 32 * 1024 * 1024      # explicit scoped-VMEM cap (safe on v5e/v6e/v7x)
_BN_EPS = 1e-5


def _rup(c, m=_LANE):
    return ((c + m - 1) // m) * m


def _spatial_tile(hw):
    for t in (1024, 512, 256, 128):
        if hw % t == 0:
            return t
    assert hw % 8 == 0, f"H*W={hw} must be a multiple of 8"
    return hw


# ----------------------------------------------------------------------------------
# Kernels
# ----------------------------------------------------------------------------------
def _pw_conv_kernel(x_ref, w_ref, scale_ref, shift_ref, o_ref):
    # x:(1,TM,Cin)  w:(Cin,Cout)  scale/shift:(1,Cout)  o:(1,TM,Cout)
    acc = jnp.dot(x_ref[0], w_ref[...], preferred_element_type=jnp.float32)
    y = acc * scale_ref[...] + shift_ref[...]
    o_ref[0] = (y * jax.nn.sigmoid(y)).astype(o_ref.dtype)


def _conv3x3_kernel(x_ref, w_ref, scale_ref, shift_ref, o_ref, acc_ref, *, H, W):
    # x:(1,H+2,W+2,Cin)  w:(3,3,Cin,Cout)  acc:(H*W,Cout)  o:(1,H,W,Cout)
    # Direct conv, stride=1, pad=1: 9 shifted taps, each an MXU matmul with contraction
    # Cin (padded to >=128).  Ref is sliced per tap (no full-tile value load); taps
    # accumulate into the f32 VMEM scratch.
    Cin = x_ref.shape[-1]
    Cout = o_ref.shape[-1]
    for kh in range(3):
        for kw in range(3):
            patch = x_ref[0, kh:kh + H, kw:kw + W, :].reshape(H * W, Cin)
            tap = jnp.dot(patch, w_ref[kh, kw], preferred_element_type=jnp.float32)
            if kh == 0 and kw == 0:
                acc_ref[...] = tap
            else:
                acc_ref[...] += tap
    y = acc_ref[...] * scale_ref[...] + shift_ref[...]      # folded BN (f32 epilogue)
    y = y * jax.nn.sigmoid(y)                                # SiLU (EUP)
    o_ref[0] = y.reshape(H, W, Cout).astype(o_ref.dtype)


def _mlca_pool_kernel(x_ref, p_ref, o_ref, acc_ref):
    # Adaptive 5x5 avg-pool as a matmul: (25, TM) @ (TM, C), reduced over spatial tiles.
    @pl.when(pl.program_id(1) == 0)
    def _init():
        acc_ref[...] = jnp.zeros_like(acc_ref)

    acc_ref[...] += jnp.dot(p_ref[...], x_ref[0], preferred_element_type=jnp.float32)

    @pl.when(pl.program_id(1) == pl.num_programs(1) - 1)
    def _done():
        o_ref[0] = acc_ref[...].astype(o_ref.dtype)


def _mlca_apply_kernel(x_ref, att_ref, m_ref, o_ref):
    # Upsample the 5x5 attention map (adaptive pool to HxW) with a (TM, 25) matrix and
    # apply it to x, all lane-dense over C.
    att_full = jnp.dot(m_ref[...], att_ref[0], preferred_element_type=jnp.float32)
    o_ref[0] = (x_ref[0] * att_full).astype(o_ref.dtype)


# ----------------------------------------------------------------------------------
# pallas_call wrappers
# ----------------------------------------------------------------------------------
def _pointwise_conv_bn_silu(x_flat, w, scale, shift):
    N, HW, Cin = x_flat.shape
    Cout = w.shape[1]
    TM = _spatial_tile(HW)
    return pl.pallas_call(
        _pw_conv_kernel,
        out_shape=jax.ShapeDtypeStruct((N, HW, Cout), x_flat.dtype),
        grid_spec=pltpu.PrefetchScalarGridSpec(
            num_scalar_prefetch=0,
            grid=(N, HW // TM),
            in_specs=[
                pl.BlockSpec((1, TM, Cin), lambda n, t: (n, t, 0)),
                pl.BlockSpec((Cin, Cout), lambda n, t: (0, 0)),
                pl.BlockSpec((1, Cout), lambda n, t: (0, 0)),
                pl.BlockSpec((1, Cout), lambda n, t: (0, 0)),
            ],
            out_specs=pl.BlockSpec((1, TM, Cout), lambda n, t: (n, t, 0)),
        ),
        compiler_params=pltpu.CompilerParams(
            dimension_semantics=("parallel", "parallel"),
            vmem_limit_bytes=_VMEM_LIMIT),
    )(x_flat, w, scale, shift)


def _conv3x3_bn_silu(x_nhwc, w_kkio, scale, shift):
    N, H, W, Cin = x_nhwc.shape
    assert w_kkio.shape[0] == 3 and w_kkio.shape[1] == 3 and w_kkio.shape[2] == Cin
    Cout = w_kkio.shape[3]
    # TODO(synk): fuse the 1-px halo into the kernel (overlapping blocks) and add H-row
    # tiling so per-step blocks stay small on v7x's 64 MiB VMEM and drop this pad pass.
    x_pad = jnp.pad(x_nhwc, ((0, 0), (1, 1), (1, 1), (0, 0)))
    kernel = functools.partial(_conv3x3_kernel, H=H, W=W)
    return pl.pallas_call(
        kernel,
        out_shape=jax.ShapeDtypeStruct((N, H, W, Cout), x_nhwc.dtype),
        grid_spec=pltpu.PrefetchScalarGridSpec(
            num_scalar_prefetch=0,
            grid=(N,),
            in_specs=[
                pl.BlockSpec((1, H + 2, W + 2, Cin), lambda n: (n, 0, 0, 0)),
                pl.BlockSpec((3, 3, Cin, Cout), lambda n: (0, 0, 0, 0)),
                pl.BlockSpec((1, Cout), lambda n: (0, 0)),
                pl.BlockSpec((1, Cout), lambda n: (0, 0)),
            ],
            out_specs=pl.BlockSpec((1, H, W, Cout), lambda n: (n, 0, 0, 0)),
            scratch_shapes=[pltpu.VMEM((H * W, Cout), jnp.float32)],
        ),
        compiler_params=pltpu.CompilerParams(
            dimension_semantics=("parallel",),
            vmem_limit_bytes=_VMEM_LIMIT),
    )(x_pad, w_kkio, scale, shift)


def _mlca_pool(x_flat, pool_mat):
    N, HW, C = x_flat.shape
    L2 = pool_mat.shape[0]
    TM = _spatial_tile(HW)
    return pl.pallas_call(
        _mlca_pool_kernel,
        out_shape=jax.ShapeDtypeStruct((N, L2, C), jnp.float32),
        grid_spec=pltpu.PrefetchScalarGridSpec(
            num_scalar_prefetch=0,
            grid=(N, HW // TM),
            in_specs=[
                pl.BlockSpec((1, TM, C), lambda n, t: (n, t, 0)),
                pl.BlockSpec((L2, TM), lambda n, t: (0, t)),
            ],
            out_specs=pl.BlockSpec((1, L2, C), lambda n, t: (n, 0, 0)),
            scratch_shapes=[pltpu.VMEM((L2, C), jnp.float32)],
        ),
        compiler_params=pltpu.CompilerParams(
            dimension_semantics=("parallel", "arbitrary"),
            vmem_limit_bytes=_VMEM_LIMIT),
    )(x_flat, pool_mat)


def _mlca_apply(x_flat, att_flat, up_mat):
    N, HW, C = x_flat.shape
    L2 = att_flat.shape[1]
    TM = _spatial_tile(HW)
    return pl.pallas_call(
        _mlca_apply_kernel,
        out_shape=jax.ShapeDtypeStruct((N, HW, C), x_flat.dtype),
        grid_spec=pltpu.PrefetchScalarGridSpec(
            num_scalar_prefetch=0,
            grid=(N, HW // TM),
            in_specs=[
                pl.BlockSpec((1, TM, C), lambda n, t: (n, t, 0)),
                pl.BlockSpec((1, L2, C), lambda n, t: (n, 0, 0)),
                pl.BlockSpec((TM, L2), lambda n, t: (t, 0)),
            ],
            out_specs=pl.BlockSpec((1, TM, C), lambda n, t: (n, t, 0)),
        ),
        compiler_params=pltpu.CompilerParams(
            dimension_semantics=("parallel", "parallel"),
            vmem_limit_bytes=_VMEM_LIMIT),
    )(x_flat, att_flat, up_mat)


# ----------------------------------------------------------------------------------
# Parameter packing / glue (plain JAX, one-time per call)
# ----------------------------------------------------------------------------------
def _adaptive_pool_matrix(out_size, in_size):
    """Row-stochastic matrix M (out,in) with M[o,i]=1/bin if i in PyTorch adaptive bin o."""
    m = np.zeros((out_size, in_size), np.float32)
    for o in range(out_size):
        s = (o * in_size) // out_size
        e = -((-(o + 1) * in_size) // out_size)
        m[o, s:e] = 1.0 / (e - s)
    return m


def _fold_bn(bn):
    gamma, beta, mean, var = bn
    scale = gamma / jnp.sqrt(var + _BN_EPS)
    shift = beta - mean * scale
    return scale, shift


def _place_vec(vec, chunk, cp):
    """Scatter consecutive `chunk`-sized channel groups to 128-aligned offsets."""
    n_ch = vec.shape[0] // chunk
    out = jnp.zeros((n_ch * cp,), jnp.float32)
    for t in range(n_ch):
        out = out.at[t * cp:t * cp + chunk].set(vec[t * chunk:(t + 1) * chunk])
    return out.reshape(1, n_ch * cp)


def _place_mat(mat, in_chunk, in_cp, out_chunk, out_cp):
    """Scatter a (Cin,Cout) 1x1-conv matrix into 128-aligned input/output chunk blocks."""
    ni = mat.shape[0] // in_chunk
    no = mat.shape[1] // out_chunk
    out = jnp.zeros((ni * in_cp, no * out_cp), jnp.float32)
    for a in range(ni):
        for b in range(no):
            out = out.at[a * in_cp:a * in_cp + in_chunk,
                         b * out_cp:b * out_cp + out_chunk].set(
                mat[a * in_chunk:(a + 1) * in_chunk,
                    b * out_chunk:(b + 1) * out_chunk])
    return out


def _mlca_small_glue(local_flat, w_global, w_local, local_weight):
    # local_flat: (N, 25, c) true channels; flattening order == PyTorch's
    # local_arv.view(b,c,-1).transpose(-1,-2) (position-major, channel-minor).
    # TODO(synk): these tiny 1-D channel convs (length 25*c) stay as scalar-scale JAX
    # glue; they are O(N*25*c*k) flops with no lane-dense Pallas formulation.
    N, L2, c = local_flat.shape
    k = int(w_local.shape[0])
    pad = (k - 1) // 2
    g = jnp.mean(local_flat, axis=1)                            # global pool of local pool
    gp = jnp.pad(g, ((0, 0), (pad, pad)))
    y_g = sum(w_global[t] * gp[:, t:t + c] for t in range(k))
    seq = local_flat.reshape(N, L2 * c)
    sp = jnp.pad(seq, ((0, 0), (pad, pad)))
    y_l = sum(w_local[t] * sp[:, t:t + L2 * c] for t in range(k))
    att_l = jax.nn.sigmoid(y_l).reshape(N, L2, c)
    att_g = jax.nn.sigmoid(y_g)[:, None, :]
    return att_g * (1.0 - local_weight) + att_l * local_weight   # (N, 25, c)


# ----------------------------------------------------------------------------------
# C2f_MLCA forward (Pallas path)
# ----------------------------------------------------------------------------------
def c2f_mlca_forward(x_nchw, params):
    c = params["c"]
    c2 = params["c2"]
    ls = params["local_size"]
    lw = params["local_weight"]

    N, c1, H, W = x_nchw.shape
    HW = H * W
    c1p, cp, c2p = _rup(c1), _rup(c), _rup(c2)

    # one-time layout glue: NCHW -> channels-last, lane-padded, flattened spatial
    x_nhwc = jnp.transpose(x_nchw, (0, 2, 3, 1))
    x_flat = jnp.pad(x_nhwc, ((0, 0), (0, 0), (0, 0), (0, c1p - c1))).reshape(N, HW, c1p)

    # cv1 (1x1): two output chunks, each lane-aligned at k*cp (so chunk() is a lane slice)
    w1 = params["cv1_w"][:, :, 0, 0].T                            # (c1, 2c)
    s1, b1 = _fold_bn(params["cv1_bn"])
    y_all = _pointwise_conv_bn_silu(
        x_flat, _place_mat(w1, c1, c1p, c, cp),
        _place_vec(s1, c, cp), _place_vec(b1, c, cp))             # (N, HW, 2*cp)

    # static adaptive-pool matrices shared by every bottleneck's MLCA
    p_mat = jnp.asarray(np.kron(_adaptive_pool_matrix(ls, H),
                                _adaptive_pool_matrix(ls, W)))    # (25, HW)  pool down
    u_mat = jnp.asarray(np.kron(_adaptive_pool_matrix(H, ls),
                                _adaptive_pool_matrix(W, ls)))    # (HW, 25)  pool up

    chunks = [y_all]                                              # holds y0 | y1
    y_last = y_all[..., cp:2 * cp]                                # (N, HW, cp)

    for bp in params["bottlenecks"]:
        # Bottleneck: 3x3 Conv -> 3x3 Conv -> MLCA (-> +x when shortcut)
        w_a = jnp.pad(jnp.transpose(bp["cv1_w"], (2, 3, 1, 0)),
                      ((0, 0), (0, 0), (0, cp - c), (0, cp - c)))
        sa, ba = _fold_bn(bp["cv1_bn"])
        w_b = jnp.pad(jnp.transpose(bp["cv2_w"], (2, 3, 1, 0)),
                      ((0, 0), (0, 0), (0, cp - c), (0, cp - c)))
        sb, bb = _fold_bn(bp["cv2_bn"])

        t = y_last.reshape(N, H, W, cp)
        t = _conv3x3_bn_silu(t, w_a, _place_vec(sa, c, cp), _place_vec(ba, c, cp))
        t = _conv3x3_bn_silu(t, w_b, _place_vec(sb, c, cp), _place_vec(bb, c, cp))
        t_flat = t.reshape(N, HW, cp)

        local = _mlca_pool(t_flat, p_mat)                         # (N, 25, cp)
        att = _mlca_small_glue(local[..., :c], bp["mlca_conv_w"],
                               bp["mlca_conv_local_w"], lw)       # (N, 25, c)
        att_p = jnp.pad(att, ((0, 0), (0, 0), (0, cp - c))).astype(t_flat.dtype)
        y_new = _mlca_apply(t_flat, att_p, u_mat)                 # (N, HW, cp)
        if bp["add"]:
            y_new = y_last + y_new
        chunks.append(y_new)
        y_last = y_new

    # cv2 (1x1) over the channel concat of all chunks (chunk boundaries are 128-aligned,
    # so the packed weight simply has zero rows on the padded lanes)
    cat = jnp.concatenate(chunks, axis=-1)                        # (N, HW, (2+n)*cp)
    w2 = params["cv2_w"][:, :, 0, 0].T                            # ((2+n)*c, c2)
    s2, b2 = _fold_bn(params["cv2_bn"])
    out = _pointwise_conv_bn_silu(
        cat, _place_mat(w2, c, cp, c2, c2p),
        _place_vec(s2, c2, c2p), _place_vec(b2, c2, c2p))         # (N, HW, c2p)

    out = out[..., :c2].reshape(N, H, W, c2)
    return jnp.transpose(out, (0, 3, 1, 2))                       # back to NCHW


# ----------------------------------------------------------------------------------
# Parameters (mirrors the PyTorch module structure)
# ----------------------------------------------------------------------------------
def init_c2f_mlca_params(key, c1, c2, n=1, shortcut=False, e=0.5,
                         local_size=5, gamma=2, b=1, local_weight=0.5):
    c = int(c2 * e)

    def conv_w(k_, shape, fan_in):
        return jax.random.normal(k_, shape, jnp.float32) / np.sqrt(fan_in)

    def bn(k_, ch):
        kg, kb, km, kv = jax.random.split(k_, 4)
        return (1.0 + 0.1 * jax.random.normal(kg, (ch,), jnp.float32),
                0.1 * jax.random.normal(kb, (ch,), jnp.float32),
                0.1 * jax.random.normal(km, (ch,), jnp.float32),
                jnp.abs(1.0 + 0.1 * jax.random.normal(kv, (ch,), jnp.float32)))

    keys = jax.random.split(key, 4 + 6 * n)
    params = {
        "c": c, "c2": c2, "local_size": local_size, "local_weight": local_weight,
        "cv1_w": conv_w(keys[0], (2 * c, c1, 1, 1), c1),
        "cv1_bn": bn(keys[1], 2 * c),
        "cv2_w": conv_w(keys[2], (c2, (2 + n) * c, 1, 1), (2 + n) * c),
        "cv2_bn": bn(keys[3], c2),
        "bottlenecks": [],
    }
    t = int(abs(math.log(c, 2) + b) / gamma)          # MLCA 1-D kernel size formula
    k1d = t if t % 2 else t + 1
    for i in range(n):
        ks = keys[4 + 6 * i: 4 + 6 * (i + 1)]
        params["bottlenecks"].append({
            "cv1_w": conv_w(ks[0], (c, c, 3, 3), c * 9),
            "cv1_bn": bn(ks[1], c),
            "cv2_w": conv_w(ks[2], (c, c, 3, 3), c * 9),
            "cv2_bn": bn(ks[3], c),
            "mlca_conv_w": conv_w(ks[4], (k1d,), k1d),
            "mlca_conv_local_w": conv_w(ks[5], (k1d,), k1d),
            "add": bool(shortcut),                    # Bottleneck add (c1==c2 here, e=1.0)
        })
    return params


# ----------------------------------------------------------------------------------
# Pure-JAX reference (mirrors the PyTorch forward exactly)
# ----------------------------------------------------------------------------------
def _ref_conv_bn_silu(x, w, bn, padding):
    y = lax.conv_general_dilated(x, w, (1, 1), [(padding, padding)] * 2,
                                 dimension_numbers=("NCHW", "OIHW", "NCHW"))
    gamma, beta, mean, var = bn
    scale = gamma / jnp.sqrt(var + _BN_EPS)
    shift = beta - mean * scale
    y = y * scale[None, :, None, None] + shift[None, :, None, None]
    return y * jax.nn.sigmoid(y)


def _ref_adaptive_avg_pool(x, oh, ow):
    H, W = x.shape[-2:]
    rows = []
    for i in range(oh):
        hs, he = (i * H) // oh, -((-(i + 1) * H) // oh)
        cols = []
        for j in range(ow):
            ws, we = (j * W) // ow, -((-(j + 1) * W) // ow)
            cols.append(jnp.mean(x[..., hs:he, ws:we], axis=(-2, -1)))
        rows.append(jnp.stack(cols, axis=-1))
    return jnp.stack(rows, axis=-2)


def _ref_conv1d_same(x, w):
    k = w.shape[0]
    pad = (k - 1) // 2
    y = lax.conv_general_dilated(x[:, None, :], w[None, None, :], (1,), [(pad, pad)],
                                 dimension_numbers=("NCH", "OIH", "NCH"))
    return y[:, 0, :]


def _ref_mlca(x, w_global, w_local, local_size, local_weight):
    b, c, m, n = x.shape
    local = _ref_adaptive_avg_pool(x, local_size, local_size)
    glob = jnp.mean(local, axis=(2, 3))
    temp_local = jnp.transpose(local.reshape(b, c, -1), (0, 2, 1)).reshape(b, -1)
    y_local = _ref_conv1d_same(temp_local, w_local)
    y_global = _ref_conv1d_same(glob, w_global)
    att_local = jax.nn.sigmoid(
        jnp.transpose(y_local.reshape(b, local_size * local_size, c), (0, 2, 1))
        .reshape(b, c, local_size, local_size))
    att_global = _ref_adaptive_avg_pool(jax.nn.sigmoid(y_global)[:, :, None, None],
                                        local_size, local_size)
    att = att_global * (1 - local_weight) + att_local * local_weight
    att_all = _ref_adaptive_avg_pool(att, m, n)
    return x * att_all


def c2f_mlca_reference(x, params):
    c = params["c"]
    y = _ref_conv_bn_silu(x, params["cv1_w"], params["cv1_bn"], padding=0)
    ys = [y[:, :c], y[:, c:2 * c]]
    for bp in params["bottlenecks"]:
        t = _ref_conv_bn_silu(ys[-1], bp["cv1_w"], bp["cv1_bn"], padding=1)
        t = _ref_conv_bn_silu(t, bp["cv2_w"], bp["cv2_bn"], padding=1)
        t = _ref_mlca(t, bp["mlca_conv_w"], bp["mlca_conv_local_w"],
                      params["local_size"], params["local_weight"])
        if bp["add"]:
            t = ys[-1] + t
        ys.append(t)
    cat = jnp.concatenate(ys, axis=1)
    return _ref_conv_bn_silu(cat, params["cv2_w"], params["cv2_bn"], padding=0)


# ----------------------------------------------------------------------------------
if __name__ == "__main__":
    # C2f_MLCA(c1=8, c2=16, n=1, shortcut=False) on x of shape (2, 8, 16, 16) NCHW.
    N, C1, C2, H, W = 2, 8, 16, 16, 16
    key = jax.random.PRNGKey(0)
    kx, kp = jax.random.split(key)
    x = jax.random.normal(kx, (N, C1, H, W), dtype=jnp.float32)
    params = init_c2f_mlca_params(kp, C1, C2, n=1, shortcut=False)

    out = c2f_mlca_forward(x, params)
    out = jax.block_until_ready(out)

    ref = c2f_mlca_reference(x, params)
    assert out.shape == (N, C2, H, W), out.shape
    assert jnp.allclose(out, ref, atol=2e-4, rtol=2e-4), (
        float(jnp.max(jnp.abs(out - ref))))

    print("KERNEL_OK")
</pallas_src>

<mosaic_0001>
module attributes {stable_mosaic.version = 11 : i64} {
  func.func @_pw_conv_kernel(%arg0: i32, %arg1: i32, %arg2: memref<1x256x128xf32, #tpu.memory_space<vmem>>, %arg3: memref<128x256xf32, #tpu.memory_space<vmem>>, %arg4: memref<1x256xf32, #tpu.memory_space<vmem>>, %arg5: memref<1x256xf32, #tpu.memory_space<vmem>>, %arg6: memref<1x256x256xf32, #tpu.memory_space<vmem>>) attributes {dimension_semantics = [#tpu.dimension_semantics<parallel>, #tpu.dimension_semantics<parallel>], iteration_bounds = array<i64: 2, 1>, scalar_prefetch = 0 : i64, scratch_operands = 0 : i64, tpu.core_type = #tpu.core_type<tc>, window_params = [{transform_indices = @transform_0, window_bounds = array<i64: 1, 256, 128>}, {pipeline_mode = #tpu.pipeline_mode<synchronous>, transform_indices = @transform_1, window_bounds = array<i64: 128, 256>}, {pipeline_mode = #tpu.pipeline_mode<synchronous>, transform_indices = @transform_2, window_bounds = array<i64: 1, 256>}, {pipeline_mode = #tpu.pipeline_mode<synchronous>, transform_indices = @transform_3, window_bounds = array<i64: 1, 256>}, {transform_indices = @transform_4, window_bounds = array<i64: 1, 256, 256>}]} {
    %c0 = arith.constant 0 : index
    %c0_0 = arith.constant 0 : index
    %c0_1 = arith.constant 0 : index
    %0 = vector.load %arg2[%c0, %c0_0, %c0_1] : memref<1x256x128xf32, #tpu.memory_space<vmem>>, vector<1x256x128xf32>
    %1 = vector.shape_cast %0 : vector<1x256x128xf32> to vector<256x128xf32>
    %c0_2 = arith.constant 0 : index
    %c0_3 = arith.constant 0 : index
    %2 = vector.load %arg3[%c0_2, %c0_3] : memref<128x256xf32, #tpu.memory_space<vmem>>, vector<128x256xf32>
    %cst = arith.constant dense<0.000000e+00> : vector<256x256xf32>
    %3 = tpu.matmul %1, %2, %cst {dimension_numbers = #tpu.dot_dimension_numbers<[1], [0], [0], [1], [0, 0, 1, 1], [], []>} : vector<256x128xf32>, vector<128x256xf32>, vector<256x256xf32> -> vector<256x256xf32>
    %c0_4 = arith.constant 0 : index
    %c0_5 = arith.constant 0 : index
    %4 = vector.load %arg4[%c0_4, %c0_5] : memref<1x256xf32, #tpu.memory_space<vmem>>, vector<1x256xf32>
    %5 = vector.broadcast %4 : vector<1x256xf32> to vector<256x256xf32>
    %6 = arith.mulf %3, %5 : vector<256x256xf32>
    %c0_6 = arith.constant 0 : index
    %c0_7 = arith.constant 0 : index
    %7 = vector.load %arg5[%c0_6, %c0_7] : memref<1x256xf32, #tpu.memory_space<vmem>>, vector<1x256xf32>
    %8 = vector.broadcast %7 : vector<1x256xf32> to vector<256x256xf32>
    %9 = arith.addf %6, %8 : vector<256x256xf32>
    %10 = arith.negf %9 : vector<256x256xf32>
    %11 = math.exp %10 : vector<256x256xf32>
    %cst_8 = arith.constant 1.000000e+00 : f32
    %12 = vector.broadcast %cst_8 : f32 to vector<256x256xf32>
    %13 = arith.addf %12, %11 : vector<256x256xf32>
    %14 = arith.divf %12, %13 : vector<256x256xf32>
    %15 = arith.mulf %9, %14 : vector<256x256xf32>
    %c0_9 = arith.constant 0 : index
    %c0_10 = arith.constant 0 : index
    %c0_11 = arith.constant 0 : index
    %16 = vector.load %arg6[%c0_9, %c0_10, %c0_11] : memref<1x256x256xf32, #tpu.memory_space<vmem>>, vector<1x256x256xf32>
    %17 = vector.shape_cast %16 : vector<1x256x256xf32> to vector<256x256xf32>
    %18 = vector.shape_cast %15 : vector<256x256xf32> to vector<1x256x256xf32>
    tpu.vector_store %arg6[%c0_9, %c0_10, %c0_11], %18 {strides = array<i32>} : memref<1x256x256xf32, #tpu.memory_space<vmem>>, vector<1x256x256xf32>,
    return
  }
  func.func @transform_0(%arg0: i32, %arg1: i32) -> (i32, i32, i32) {
    %c0_i32 = arith.constant 0 : i32
    %c0_i32_0 = arith.constant 0 : i32
    return %arg0, %arg1, %c0_i32 : i32, i32, i32
  }
  func.func @transform_1(%arg0: i32, %arg1: i32) -> (i32, i32) {
    %c0_i32 = arith.constant 0 : i32
    %c0_i32_0 = arith.constant 0 : i32
    %c0_i32_1 = arith.constant 0 : i32
    return %c0_i32, %c0_i32_0 : i32, i32
  }
  func.func @transform_2(%arg0: i32, %arg1: i32) -> (i32, i32) {
    %c0_i32 = arith.constant 0 : i32
    %c0_i32_0 = arith.constant 0 : i32
    %c0_i32_1 = arith.constant 0 : i32
    return %c0_i32, %c0_i32_0 : i32, i32
  }
  func.func @transform_3(%arg0: i32, %arg1: i32) -> (i32, i32) {
    %c0_i32 = arith.constant 0 : i32
    %c0_i32_0 = arith.constant 0 : i32
    %c0_i32_1 = arith.constant 0 : i32
    return %c0_i32, %c0_i32_0 : i32, i32
  }
  func.func @transform_4(%arg0: i32, %arg1: i32) -> (i32, i32, i32) {
    %c0_i32 = arith.constant 0 : i32
    %c0_i32_0 = arith.constant 0 : i32
    return %arg0, %arg1, %c0_i32 : i32, i32, i32
  }
}

</mosaic_0001>

<llo_original>
// kernel: tpu_custom_call.1
$region0: #{tpu_custom_call.1}
  #allocation0 [shape = 'u32[]', space=smem, size = 0x4, offset = 0x4, fixed_abs, tag = 'smem constant byte address 0x4 - core index']
  #allocation1 [shape = 'u32[144,128]{1,0:T(1,128)}', space=vmem, size = 0x12000, scoped, tag = 'internal scratch']
  %s0 = inlined_call_operand.hbm [shape: f32[2,256,128], index: 0, kind: input, shape index: {}]
  %s1 = inlined_call_operand.hbm [shape: f32[128,256], index: 1, kind: input, shape index: {}]
  %s2 = inlined_call_operand.vmem [shape: f32[1,256], index: 2, kind: input, shape index: {}]
  %s3 = inlined_call_operand.vmem [shape: f32[1,256], index: 3, kind: input, shape index: {}]
  %s4 = inlined_call_operand.hbm [shape: f32[2,256,256], index: 4, kind: output, shape index: {}]
  %s5 = sld [smem:[#allocation0]]
  $region57: #{tpu_custom_call.1} parent=0
    _
  %s7 = ssub.s32 1, %s5
  %s8 = scalar_select 0, %s7, %s5
  $region1: #{tpu_custom_call.1} parent=0
    #allocation2 [shape = 'u8[262144]{0}', space=vmem, size = 0x40000, scoped, tag = 'input window, operand 0']
    #allocation3 [shape = 's32[2]{0}', space=sflag, size = 0x8, scoped, tag = 'scoped memory for tpu_custom_call.1']
    #allocation4 [shape = 's32[2]{0}', space=sflag, size = 0x8, scoped, tag = 'scoped memory for tpu_custom_call.1']
    #allocation5 [shape = 'u8[131072]{0}', space=vmem, size = 0x20000, scoped, tag = 'input window, operand 1, single buffered']
    #allocation6 [shape = 's32[1]{0}', space=sflag, size = 0x4, scoped, tag = 'scoped memory for tpu_custom_call.1']
    #allocation7 [shape = 'u8[524288]{0}', space=vmem, size = 0x80000, scoped, tag = 'output window, operand 0']
    %9 = vsyncpa [#allocation3], 0
    %s10 = scalar_lea.sflag [#allocation3], 1
    %11 = vsyncpa %s10, 0
    %12 = vsyncpa [#allocation6], 0
    %13 = vsyncpa [#allocation4], 0
    %s14 = scalar_lea.sflag [#allocation4], 1
    %15 = vsyncpa %s14, 0
    loop: start=0, step=1, limit=4
    $region2: #{tpu_custom_call.1} parent=1 // loop_pre_header
      _
    $region3: #{tpu_custom_call.1} parent=1 // loop_header
      %s17 = sphi 0, %s21
      %p18 = scmp.ge.s32.totalorder %s17, 4
      %s24 = sphi 0, %s36
      %s25 = sphi 0, %s32
      %s26 = sphi 0, %s24
      %s27 = sphi 0, %s25
      %s28 = sphi 0, %s26
      %s29 = sphi 0, %s27
      %s41 = sphi 0, %s43
      %s44 = sphi 0, %s41
      %s45 = sphi 0, %s44
      %s61 = sphi 0, %s45
      %s65 = sphi 0, %s65
      %s67 = sphi 0, %s65
      %s68 = sphi 0, %s67
      %s82 = sphi 0, %s68
      %s86 = sphi 0, %s86
      %s88 = sphi 0, %s86
      %s89 = sphi 0, %s88
      %s103 = sphi 0, %s89
      %s107 = sphi 0, %s107
      %s109 = sphi 0, %s107
      %s110 = sphi 0, %s109
      %s124 = sphi 0, %s110
      %s132 = sphi 0, %s134
      %s135 = sphi 0, %s132
      %s136 = sphi 0, %s135
      %s152 = sphi 0, %s136
    $region4: #{tpu_custom_call.1} parent=1 // loop_header_branch
      %20 = sbr.rel (%p18) target = $region8
    $region5: #{tpu_custom_call.1} parent=1 // loop_body
      %s22 = ssub.s32 %s17, 1
      %s23 = ssub.s32 %s17, 2
      %s30 = sadd.s32 1, %s25
      %p31 = scmp.ge.s32.totalorder %s30, 1
      %s32 = scalar_select %p31, 0, %s30
      %s33 = sadd.s32 1, %s24
      %s34 = scalar_select %p31, %s33, %s24
      %p35 = scmp.ge.s32.totalorder %s34, 2
      %s36 = scalar_select %p35, 0, %s34
      %s37 = ssub.s32 %s24, %s36
      %s38 = ssub.s32 %s25, %s32
      %s39 = sor.u32 %s37, %s38
      %p40 = scmp.eq.s32.totalorder %s39, 0
      %s42 = sadd.s32 %s41, 1
      %s43 = scalar_select %p40, %s41, %s42
      %p46 = pneg %p40
      %p47 = scmp.eq.s32.totalorder %s17, 1
      %p48 = por %p46, %p47
      %p49 = scmp.ne.s32.totalorder %s41, %s44
      %p50 = scmp.eq.s32.totalorder %s17, 0
      %p51 = por %p49, %p50
      %p52 = scmp.ne.s32.totalorder %s41, %s44
      %p53 = scmp.eq.s32.totalorder %s22, 1
      %p54 = por %p52, %p53
      %p55 = scmp.ne.s32.totalorder %s44, %s45
      %p56 = scmp.eq.s32.totalorder %s22, 0
      %p57 = por %p55, %p56
      %p58 = scmp.ne.s32.totalorder %s44, %s45
      %p59 = scmp.eq.s32.totalorder %s23, 1
      %p60 = por %p58, %p59
      %p62 = scmp.ne.s32.totalorder %s45, %s61
      %p63 = scmp.eq.s32.totalorder %s23, 0
      %p64 = por %p62, %p63
      %s66 = sadd.s32 %s65, 1
      %p69 = scmp.eq.s32.totalorder %s17, 1
      %p70 = scmp.ne.s32.totalorder %s65, %s67
      %p71 = scmp.eq.s32.totalorder %s17, 0
      %p72 = por %p70, %p71
      %p73 = scmp.ne.s32.totalorder %s65, %s67
      %p74 = scmp.eq.s32.totalorder %s22, 1
      %p75 = por %p73, %p74
      %p76 = scmp.ne.s32.totalorder %s67, %s68
      %p77 = scmp.eq.s32.totalorder %s22, 0
      %p78 = por %p76, %p77
      %p79 = scmp.ne.s32.totalorder %s67, %s68
      %p80 = scmp.eq.s32.totalorder %s23, 1
      %p81 = por %p79, %p80
      %p83 = scmp.ne.s32.totalorder %s68, %s82
      %p84 = scmp.eq.s32.totalorder %s23, 0
      %p85 = por %p83, %p84
      %s87 = sadd.s32 %s86, 1
      %p90 = scmp.eq.s32.totalorder %s17, 1
      %p91 = scmp.ne.s32.totalorder %s86, %s88
      %p92 = scmp.eq.s32.totalorder %s17, 0
      %p93 = por %p91, %p92
      %p94 = scmp.ne.s32.totalorder %s86, %s88
      %p95 = scmp.eq.s32.totalorder %s22, 1
      %p96 = por %p94, %p95
      %p97 = scmp.ne.s32.totalorder %s88, %s89
      %p98 = scmp.eq.s32.totalorder %s22, 0
      %p99 = por %p97, %p98
      %p100 = scmp.ne.s32.totalorder %s88, %s89
      %p101 = scmp.eq.s32.totalorder %s23, 1
      %p102 = por %p100, %p101
      %p104 = scmp.ne.s32.totalorder %s89, %s103
      %p105 = scmp.eq.s32.totalorder %s23, 0
      %p106 = por %p104, %p105
      %s108 = sadd.s32 %s107, 1
      %p111 = scmp.eq.s32.totalorder %s17, 1
      %p112 = scmp.ne.s32.totalorder %s107, %s109
      %p113 = scmp.eq.s32.totalorder %s17, 0
      %p114 = por %p112, %p113
      %p115 = scmp.ne.s32.totalorder %s107, %s109
      %p116 = scmp.eq.s32.totalorder %s22, 1
      %p117 = por %p115, %p116
      %p118 = scmp.ne.s32.totalorder %s109, %s110
      %p119 = scmp.eq.s32.totalorder %s22, 0
      %p120 = por %p118, %p119
      %p121 = scmp.ne.s32.totalorder %s109, %s110
      %p122 = scmp.eq.s32.totalorder %s23, 1
      %p123 = por %p121, %p122
      %p125 = scmp.ne.s32.totalorder %s110, %s124
      %p126 = scmp.eq.s32.totalorder %s23, 0
      %p127 = por %p125, %p126
      %s128 = ssub.s32 %s24, %s36
      %s129 = ssub.s32 %s25, %s32
      %s130 = sor.u32 %s128, %s129
      %p131 = scmp.eq.s32.totalorder %s130, 0
      %s133 = sadd.s32 %s132, 1
      %s134 = scalar_select %p131, %s132, %s133
      %p137 = pneg %p131
      %p138 = scmp.eq.s32.totalorder %s17, 1
      %p139 = por %p137, %p138
      %p140 = scmp.ne.s32.totalorder %s132, %s135
      %p141 = scmp.eq.s32.totalorder %s17, 0
      %p142 = por %p140, %p141
      %p143 = scmp.ne.s32.totalorder %s132, %s135
      %p144 = scmp.eq.s32.totalorder %s22, 1
      %p145 = por %p143, %p144
      %p146 = scmp.ne.s32.totalorder %s135, %s136
      %p147 = scmp.eq.s32.totalorder %s22, 0
      %p148 = por %p146, %p147
      %p149 = scmp.ne.s32.totalorder %s135, %s136
      %p150 = scmp.eq.s32.totalorder %s23, 1
      %p151 = por %p149, %p150
      %p153 = scmp.ne.s32.totalorder %s136, %s152
      %p154 = scmp.eq.s32.totalorder %s23, 0
      %p155 = por %p153, %p154
      %p156 = scmp.le.s32.totalorder 1, %s17
      %p157 = scmp.lt.s32.totalorder %s17, 3
      %p158 = pnand %p156, %p157
      %p159 = pneg %p158
      // Predicated region
      $region9: #{tpu_custom_call.1} parent=5 // pred_check
        _
      $region10: #{tpu_custom_call.1} parent=5 // pred_check_branch
        %161 = sbr.rel (%p158) target = $region12
      $region11: #{tpu_custom_call.1} parent=5 // pred_region
        %s162 = ssub.s32 %s17, 1
        // Predicated region
        $region13: #{tpu_custom_call.1} parent=11 // pred_check
          %p163 = pneg %p78
        $region14: #{tpu_custom_call.1} parent=11 // pred_check_branch
          %165 = sbr.rel (%p163) target = $region16
        $region15: #{tpu_custom_call.1} parent=11 // pred_region
          %s167 = ssub.s32 4096, 4096
          %168 = vsyncadd [#allocation6], %s167
          %s169 = sshll.u32 [#allocation5], 4
          %s170 = int_to_ptr.vmem [resolvable:$true] %s169
          %175 = dma.hbm_to_vmem [thread:$0]  %s1, 4096, %s170, [#allocation6], 256, 256, 16
        $region16: #{tpu_custom_call.1} parent=11 // pred_fallthru
          _
        // Predicated region
        $region17: #{tpu_custom_call.1} parent=11 // pred_check
          %p176 = pneg %p99
        $region18: #{tpu_custom_call.1} parent=11 // pred_check_branch
          %178 = sbr.rel (%p176) target = $region20
        $region19: #{tpu_custom_call.1} parent=11 // pred_region
          _
        $region20: #{tpu_custom_call.1} parent=11 // pred_fallthru
          _
        // Predicated region
        $region21: #{tpu_custom_call.1} parent=11 // pred_check
          %p179 = pneg %p120
        $region22: #{tpu_custom_call.1} parent=11 // pred_check_branch
          %181 = sbr.rel (%p179) target = $region24
        $region23: #{tpu_custom_call.1} parent=11 // pred_region
          _
        $region24: #{tpu_custom_call.1} parent=11 // pred_fallthru
          _
      $region12: #{tpu_custom_call.1} parent=5 // pred_fallthru
        _
      %p182 = scmp.lt.s32.totalorder %s17, 2
      // Predicated region
      $region25: #{tpu_custom_call.1} parent=5 // pred_check
        %p183 = pneg %p182
      $region26: #{tpu_custom_call.1} parent=5 // pred_check_branch
        %185 = sbr.rel (%p183) target = $region28
      $region27: #{tpu_custom_call.1} parent=5 // pred_region
        // Predicated region
        $region29: #{tpu_custom_call.1} parent=27 // pred_check
          %p186 = pneg %p51
        $region30: #{tpu_custom_call.1} parent=27 // pred_check_branch
          %188 = sbr.rel (%p186) target = $region32
        $region31: #{tpu_custom_call.1} parent=27 // pred_region
          %s189 = sand.u32 %s41, 1
          %s190 = scalar_lea.sflag [#allocation3], %s189
          %s191 = sand.u32 %s41, 1
          %s192 = smul.addr %s191, 256
          %s193 = scalar_lea.vmem [#allocation2], %s192
          %s194 = smul.u32 32, %s25
          %s196 = ssub.s32 4096, 4096
          %197 = vsyncadd %s190, %s196
          %s198 = smul.addr %s24, 32
          %s199 = sadd.s32 %s194, %s198
          %s200 = smul.addr %s199, 128
          %s201 = scalar_lea.hbm %s0, %s200
          %s202 = sshll.u32 %s193, 4
          %s203 = int_to_ptr.vmem [resolvable:$true] %s202
          %208 = dma.hbm_to_vmem [thread:$0]  %s201, 4096, %s203, %s190, 128, 128, 8
        $region32: #{tpu_custom_call.1} parent=27 // pred_fallthru
          _
      $region28: #{tpu_custom_call.1} parent=5 // pred_fallthru
        _
      %p209 = scmp.le.s32.totalorder 1, %s17
      %p210 = scmp.lt.s32.totalorder %s17, 3
      %p211 = pnand %p209, %p210
      %p212 = pneg %p211
      // Predicated region
      $region33: #{tpu_custom_call.1} parent=5 // pred_check
        _
      $region34: #{tpu_custom_call.1} parent=5 // pred_check_branch
        %214 = sbr.rel (%p211) target = $region36
      $region35: #{tpu_custom_call.1} parent=5 // pred_region
        %s215 = ssub.s32 %s17, 1
        %s216 = sand.u32 %s44, 1
        %s217 = scalar_lea.sflag [#allocation3], %s216
        %s218 = sand.u32 %s44, 1
        %s219 = smul.addr %s218, 256
        %s220 = scalar_lea.vmem [#allocation2], %s219
        // Predicated region
        $region37: #{tpu_custom_call.1} parent=35 // pred_check
          %p221 = pneg %p57
        $region38: #{tpu_custom_call.1} parent=35 // pred_check_branch
          %223 = sbr.rel (%p221) target = $region40
        $region39: #{tpu_custom_call.1} parent=35 // pred_region
          %224 = dma.done %s217, 4096
        $region40: #{tpu_custom_call.1} parent=35 // pred_fallthru
          _
        // Predicated region
        $region41: #{tpu_custom_call.1} parent=35 // pred_check
          %p225 = pneg %p78
        $region42: #{tpu_custom_call.1} parent=35 // pred_check_branch
          %227 = sbr.rel (%p225) target = $region44
        $region43: #{tpu_custom_call.1} parent=35 // pred_region
          %228 = dma.done [#allocation6], 4096
        $region44: #{tpu_custom_call.1} parent=35 // pred_fallthru
          _
        %s229 = sand.u32 %s44, 1
        %s230 = scalar_lea.sflag [#allocation3], %s229
        %s231 = sand.u32 %s44, 1
        %s232 = smul.addr %s231, 256
        %s233 = scalar_lea.vmem [#allocation2], %s232
        %p234 = pneg %p57
        %p235 = pneg %p54
        %p236 = pneg %p78
        %p237 = pneg %p75
        %p238 = pneg %p99
        %p239 = pneg %p96
        %p240 = pneg %p120
        %p241 = pneg %p117
        %p242 = pneg %p148
        %p243 = pneg %p145
        %s244 = sand.u32 %s135, 1
        %s245 = scalar_lea.sflag [#allocation4], %s244
        %s246 = sand.u32 %s135, 1
        %s247 = smul.addr %s246, 512
        %s248 = scalar_lea.vmem [#allocation7], %s247
        %s249 = smul.u32 32, %s27
        %s250 = smul.u32 32, %s27
        %v251 = vld [vmem:[%s220] sm:$0xff]
        %v252 = vld [vmem:[%s220 + $0x8] sm:$0xff]
        %v253 = vld [vmem:[%s220 + $0x10] sm:$0xff]
        %v254 = vld [vmem:[%s220 + $0x18] sm:$0xff]
        %v255 = vld [vmem:[%s220 + $0x20] sm:$0xff]
        %v256 = vld [vmem:[%s220 + $0x28] sm:$0xff]
        %v257 = vld [vmem:[%s220 + $0x30] sm:$0xff]
        %v258 = vld [vmem:[%s220 + $0x38] sm:$0xff]
        %v259 = vld [vmem:[%s220 + $0x40] sm:$0xff]
        %v260 = vld [vmem:[%s220 + $0x48] sm:$0xff]
        %v261 = vld [vmem:[%s220 + $0x50] sm:$0xff]
        %v262 = vld [vmem:[%s220 + $0x58] sm:$0xff]
        %v263 = vld [vmem:[%s220 + $0x60] sm:$0xff]
        %v264 = vld [vmem:[%s220 + $0x68] sm:$0xff]
        %v265 = vld [vmem:[%s220 + $0x70] sm:$0xff]
        %v266 = vld [vmem:[%s220 + $0x78] sm:$0xff]
        %v267 = vld [vmem:[%s220 + $0x80] sm:$0xff]
        %v268 = vld [vmem:[%s220 + $0x88] sm:$0xff]
        %v269 = vld [vmem:[%s220 + $0x90] sm:$0xff]
        %v270 = vld [vmem:[%s220 + $0x98] sm:$0xff]
        %v271 = vld [vmem:[%s220 + $0xa0] sm:$0xff]
        %v272 = vld [vmem:[%s220 + $0xa8] sm:$0xff]
        %v273 = vld [vmem:[%s220 + $0xb0] sm:$0xff]
        %v274 = vld [vmem:[%s220 + $0xb8] sm:$0xff]
        %v275 = vld [vmem:[%s220 + $0xc0] sm:$0xff]
        %v276 = vld [vmem:[%s220 + $0xc8] sm:$0xff]
        %v277 = vld [vmem:[%s220 + $0xd0] sm:$0xff]
        %v278 = vld [vmem:[%s220 + $0xd8] sm:$0xff]
        %v279 = vld [vmem:[%s220 + $0xe0] sm:$0xff]
        %v280 = vld [vmem:[%s220 + $0xe8] sm:$0xff]
        %v281 = vld [vmem:[%s220 + $0xf0] sm:$0xff]
        %v282 = vld [vmem:[%s220 + $0xf8] sm:$0xff]
        %v283 = vld [vmem:[#allocation5] sm:$0xff]
        %v284 = vld [vmem:[#allocation5 + $0x8] sm:$0xff]
        %v285 = vld [vmem:[#allocation5 + $0x10] sm:$0xff]
        %v286 = vld [vmem:[#allocation5 + $0x18] sm:$0xff]
        %v287 = vld [vmem:[#allocation5 + $0x20] sm:$0xff]
        %v288 = vld [vmem:[#allocation5 + $0x28] sm:$0xff]
        %v289 = vld [vmem:[#allocation5 + $0x30] sm:$0xff]
        %v290 = vld [vmem:[#allocation5 + $0x38] sm:$0xff]
        %v291 = vld [vmem:[#allocation5 + $0x40] sm:$0xff]
        %v292 = vld [vmem:[#allocation5 + $0x48] sm:$0xff]
        %v293 = vld [vmem:[#allocation5 + $0x50] sm:$0xff]
        %v294 = vld [vmem:[#allocation5 + $0x58] sm:$0xff]
        %v295 = vld [vmem:[#allocation5 + $0x60] sm:$0xff]
        %v296 = vld [vmem:[#allocation5 + $0x68] sm:$0xff]
        %v297 = vld [vmem:[#allocation5 + $0x70] sm:$0xff]
        %v298 = vld [vmem:[#allocation5 + $0x78] sm:$0xff]
        %v299 = vld [vmem:[#allocation5 + $0x80] sm:$0xff]
        %v300 = vld [vmem:[#allocation5 + $0x88] sm:$0xff]
        %v301 = vld [vmem:[#allocation5 + $0x90] sm:$0xff]
        %v302 = vld [vmem:[#allocation5 + $0x98] sm:$0xff]
        %v303 = vld [vmem:[#allocation5 + $0xa0] sm:$0xff]
        %v304 = vld [vmem:[#allocation5 + $0xa8] sm:$0xff]
        %v305 = vld [vmem:[#allocation5 + $0xb0] sm:$0xff]
        %v306 = vld [vmem:[#allocation5 + $0xb8] sm:$0xff]
        %v307 = vld [vmem:[#allocation5 + $0xc0] sm:$0xff]
        %v308 = vld [vmem:[#allocation5 + $0xc8] sm:$0xff]
        %v309 = vld [vmem:[#allocation5 + $0xd0] sm:$0xff]
        %v310 = vld [vmem:[#allocation5 + $0xd8] sm:$0xff]
        %v311 = vld [vmem:[#allocation5 + $0xe0] sm:$0xff]
        %v312 = vld [vmem:[#allocation5 + $0xe8] sm:$0xff]
        %v313 = vld [vmem:[#allocation5 + $0xf0] sm:$0xff]
        %v314 = vld [vmem:[#allocation5 + $0xf8] sm:$0xff]
        %315 = vmatprep.subr.mxu0 %v314
        %316 = vmatpush1.msra.mxu0 %v313
        %317 = vmatprep.subr.mxu0 %v312
        %318 = vmatpush1.msra.mxu0 %v311
        %319 = vmatprep.subr.mxu0 %v310
        %320 = vmatpush1.msra.mxu0 %v309
        %321 = vmatprep.subr.mxu0 %v308
        %322 = vmatpush1.msra.mxu0 %v307
        %323 = vmatprep.subr.mxu0 %v306
        %324 = vmatpush1.msra.mxu0 %v305
        %325 = vmatprep.subr.mxu0 %v304
        %326 = vmatpush1.msra.mxu0 %v303
        %327 = vmatprep.subr.mxu0 %v302
        %328 = vmatpush1.msra.mxu0 %v301
        %329 = vmatprep.subr.mxu0 %v300
        %330 = vmatpush1.msra.mxu0 %v299
        %331 = vmatprep.subr.mxu0 %v298
        %332 = vmatpush1.msra.mxu0 %v297
        %333 = vmatprep.subr.mxu0 %v296
        %334 = vmatpush1.msra.mxu0 %v295
        %335 = vmatprep.subr.mxu0 %v294
        %336 = vmatpush1.msra.mxu0 %v293
        %337 = vmatprep.subr.mxu0 %v292
        %338 = vmatpush1.msra.mxu0 %v291
        %339 = vmatprep.subr.mxu0 %v290
        %340 = vmatpush1.msra.mxu0 %v289
        %341 = vmatprep.subr.mxu0 %v288
        %342 = vmatpush1.msra.mxu0 %v287
        %343 = vmatprep.subr.mxu0 %v286
        %344 = vmatpush1.msra.mxu0 %v285
        %345 = vmatprep.subr.mxu0 %v284
        %346 = vmatpush1.msra.mxu0 %v283
        %347 = vmatprep.subr.mxu0 0.0
        %348 = vmatpush2.msra.mxu0 0.0
        %349 = vmatprep.subr.mxu0 0.0
        %350 = vmatpush2.msra.mxu0 0.0
        %351 = vmatprep.subr.mxu0 0.0
        %352 = vmatpush2.msra.mxu0 0.0
        %353 = vmatprep.subr.mxu0 0.0
        %354 = vmatpush2.msra.mxu0 0.0
        %355 = vmatprep.subr.mxu0 0.0
        %356 = vmatpush2.msra.mxu0 0.0
        %357 = vmatprep.subr.mxu0 0.0
        %358 = vmatpush2.msra.mxu0 0.0
        %359 = vmatprep.subr.mxu0 0.0
        %360 = vmatpush2.msra.mxu0 0.0
        %361 = vmatprep.subr.mxu0 0.0
        %362 = vmatpush2.msra.mxu0 0.0
        %363 = vmatprep.subr.mxu0 0.0
        %364 = vmatpush2.msra.mxu0 0.0
        %365 = vmatprep.subr.mxu0 0.0
        %366 = vmatpush2.msra.mxu0 0.0
        %367 = vmatprep.subr.mxu0 0.0
        %368 = vmatpush2.msra.mxu0 0.0
        %369 = vmatprep.subr.mxu0 0.0
        %370 = vmatpush2.msra.mxu0 0.0
        %371 = vmatprep.subr.mxu0 0.0
        %372 = vmatpush2.msra.mxu0 0.0
        %373 = vmatprep.subr.mxu0 0.0
        %374 = vmatpush2.msra.mxu0 0.0
        %375 = vmatprep.subr.mxu0 0.0
        %376 = vmatpush2.msra.mxu0 0.0
        %377 = vmatprep.subr.mxu0 0.0
        %378 = vmatpush2.msra.mxu0 0.0
        %379 = vmatprep.mubr.f32.mxu0 0.0
        %380 = vmatmul.mubr.f32.gmra.mxu0 %v251
        %v381 = vpop.f32.mrf.mxu0
        %v382 = vadd.f32 0.0, %v381
        %v383 = vpop.f32.mrf.mxu0
        %v384 = vadd.f32 0.0, %v383
        %385 = vmatprep.mubr.f32.mxu0 0.0
        %386 = vmatmul.mubr.f32.gmra.mxu0 %v252
        %v387 = vpop.f32.mrf.mxu0
        %v388 = vadd.f32 0.0, %v387
        %v389 = vpop.f32.mrf.mxu0
        %v390 = vadd.f32 0.0, %v389
        %391 = vmatprep.mubr.f32.mxu0 0.0
        %392 = vmatmul.mubr.f32.gmra.mxu0 %v253
        %v393 = vpop.f32.mrf.mxu0
        %v394 = vadd.f32 0.0, %v393
        %v395 = vpop.f32.mrf.mxu0
        %v396 = vadd.f32 0.0, %v395
        %397 = vmatprep.mubr.f32.mxu0 0.0
        %398 = vmatmul.mubr.f32.gmra.mxu0 %v254
        %v399 = vpop.f32.mrf.mxu0
        %v400 = vadd.f32 0.0, %v399
        %v401 = vpop.f32.mrf.mxu0
        %v402 = vadd.f32 0.0, %v401
        %403 = vmatprep.mubr.f32.mxu0 0.0
        %404 = vmatmul.mubr.f32.gmra.mxu0 %v255
        %v405 = vpop.f32.mrf.mxu0
        %v406 = vadd.f32 0.0, %v405
        %v407 = vpop.f32.mrf.mxu0
        %v408 = vadd.f32 0.0, %v407
        %409 = vmatprep.mubr.f32.mxu0 0.0
        %410 = vmatmul.mubr.f32.gmra.mxu0 %v256
        %v411 = vpop.f32.mrf.mxu0
        %v412 = vadd.f32 0.0, %v411
        %v413 = vpop.f32.mrf.mxu0
        %v414 = vadd.f32 0.0, %v413
        %415 = vmatprep.mubr.f32.mxu0 0.0
        %416 = vmatmul.mubr.f32.gmra.mxu0 %v257
        %v417 = vpop.f32.mrf.mxu0
        %v418 = vadd.f32 0.0, %v417
        %v419 = vpop.f32.mrf.mxu0
        %v420 = vadd.f32 0.0, %v419
        %421 = vmatprep.mubr.f32.mxu0 0.0
        %422 = vmatmul.mubr.f32.gmra.mxu0 %v258
        %v423 = vpop.f32.mrf.mxu0
        %v424 = vadd.f32 0.0, %v423
        %v425 = vpop.f32.mrf.mxu0
        %v426 = vadd.f32 0.0, %v425
        %427 = vmatprep.mubr.f32.mxu0 0.0
        %428 = vmatmul.mubr.f32.gmra.mxu0 %v259
        %v429 = vpop.f32.mrf.mxu0
        %v430 = vadd.f32 0.0, %v429
        %v431 = vpop.f32.mrf.mxu0
        %v432 = vadd.f32 0.0, %v431
        %433 = vmatprep.mubr.f32.mxu0 0.0
        %434 = vmatmul.mubr.f32.gmra.mxu0 %v260
        %v435 = vpop.f32.mrf.mxu0
        %v436 = vadd.f32 0.0, %v435
        %v437 = vpop.f32.mrf.mxu0
        %v438 = vadd.f32 0.0, %v437
        %439 = vmatprep.mubr.f32.mxu0 0.0
        %440 = vmatmul.mubr.f32.gmra.mxu0 %v261
        %v441 = vpop.f32.mrf.mxu0
        %v442 = vadd.f32 0.0, %v441
        %v443 = vpop.f32.mrf.mxu0
        %v444 = vadd.f32 0.0, %v443
        %445 = vmatprep.mubr.f32.mxu0 0.0
        %446 = vmatmul.mubr.f32.gmra.mxu0 %v262
        %v447 = vpop.f32.mrf.mxu0
        %v448 = vadd.f32 0.0, %v447
        %v449 = vpop.f32.mrf.mxu0
        %v450 = vadd.f32 0.0, %v449
        %451 = vmatprep.mubr.f32.mxu0 0.0
        %452 = vmatmul.mubr.f32.gmra.mxu0 %v263
        %v453 = vpop.f32.mrf.mxu0
        %v454 = vadd.f32 0.0, %v453
        %v455 = vpop.f32.mrf.mxu0
        %v456 = vadd.f32 0.0, %v455
        %457 = vmatprep.mubr.f32.mxu0 0.0
        %458 = vmatmul.mubr.f32.gmra.mxu0 %v264
        %v459 = vpop.f32.mrf.mxu0
        %v460 = vadd.f32 0.0, %v459
        %v461 = vpop.f32.mrf.mxu0
        %v462 = vadd.f32 0.0, %v461
        %463 = vmatprep.mubr.f32.mxu0 0.0
        %464 = vmatmul.mubr.f32.gmra.mxu0 %v265
        %v465 = vpop.f32.mrf.mxu0
        %v466 = vadd.f32 0.0, %v465
        %v467 = vpop.f32.mrf.mxu0
        %v468 = vadd.f32 0.0, %v467
        %469 = vmatprep.mubr.f32.mxu0 0.0
        %470 = vmatmul.mubr.f32.gmra.mxu0 %v266
        %v471 = vpop.f32.mrf.mxu0
        %v472 = vadd.f32 0.0, %v471
        %v473 = vpop.f32.mrf.mxu0
        %v474 = vadd.f32 0.0, %v473
        %475 = vmatprep.mubr.f32.mxu0 0.0
        %476 = vmatmul.mubr.f32.gmra.mxu0 %v267
        %v477 = vpop.f32.mrf.mxu0
        %v478 = vadd.f32 0.0, %v477
        %v479 = vpop.f32.mrf.mxu0
        %v480 = vadd.f32 0.0, %v479
        %481 = vmatprep.mubr.f32.mxu0 0.0
        %482 = vmatmul.mubr.f32.gmra.mxu0 %v268
        %v483 = vpop.f32.mrf.mxu0
        %v484 = vadd.f32 0.0, %v483
        %v485 = vpop.f32.mrf.mxu0
        %v486 = vadd.f32 0.0, %v485
        %487 = vmatprep.mubr.f32.mxu0 0.0
        %488 = vmatmul.mubr.f32.gmra.mxu0 %v269
        %v489 = vpop.f32.mrf.mxu0
        %v490 = vadd.f32 0.0, %v489
        %v491 = vpop.f32.mrf.mxu0
        %v492 = vadd.f32 0.0, %v491
        %493 = vmatprep.mubr.f32.mxu0 0.0
        %494 = vmatmul.mubr.f32.gmra.mxu0 %v270
        %v495 = vpop.f32.mrf.mxu0
        %v496 = vadd.f32 0.0, %v495
        %v497 = vpop.f32.mrf.mxu0
        %v498 = vadd.f32 0.0, %v497
        %499 = vmatprep.mubr.f32.mxu0 0.0
        %500 = vmatmul.mubr.f32.gmra.mxu0 %v271
        %v501 = vpop.f32.mrf.mxu0
        %v502 = vadd.f32 0.0, %v501
        %v503 = vpop.f32.mrf.mxu0
        %v504 = vadd.f32 0.0, %v503
        %505 = vmatprep.mubr.f32.mxu0 0.0
        %506 = vmatmul.mubr.f32.gmra.mxu0 %v272
        %v507 = vpop.f32.mrf.mxu0
        %v508 = vadd.f32 0.0, %v507
        %v509 = vpop.f32.mrf.mxu0
        %v510 = vadd.f32 0.0, %v509
        %511 = vmatprep.mubr.f32.mxu0 0.0
        %512 = vmatmul.mubr.f32.gmra.mxu0 %v273
        %v513 = vpop.f32.mrf.mxu0
        %v514 = vadd.f32 0.0, %v513
        %v515 = vpop.f32.mrf.mxu0
        %v516 = vadd.f32 0.0, %v515
        %517 = vmatprep.mubr.f32.mxu0 0.0
        %518 = vmatmul.mubr.f32.gmra.mxu0 %v274
        %v519 = vpop.f32.mrf.mxu0
        %v520 = vadd.f32 0.0, %v519
        %v521 = vpop.f32.mrf.mxu0
        %v522 = vadd.f32 0.0, %v521
        %523 = vmatprep.mubr.f32.mxu0 0.0
        %524 = vmatmul.mubr.f32.gmra.mxu0 %v275
        %v525 = vpop.f32.mrf.mxu0
        %v526 = vadd.f32 0.0, %v525
        %v527 = vpop.f32.mrf.mxu0
        %v528 = vadd.f32 0.0, %v527
        %529 = vmatprep.mubr.f32.mxu0 0.0
        %530 = vmatmul.mubr.f32.gmra.mxu0 %v276
        %v531 = vpop.f32.mrf.mxu0
        %v532 = vadd.f32 0.0, %v531
        %v533 = vpop.f32.mrf.mxu0
        %v534 = vadd.f32 0.0, %v533
        %535 = vmatprep.mubr.f32.mxu0 0.0
        %536 = vmatmul.mubr.f32.gmra.mxu0 %v277
        %v537 = vpop.f32.mrf.mxu0
        %v538 = vadd.f32 0.0, %v537
        %v539 = vpop.f32.mrf.mxu0
        %v540 = vadd.f32 0.0, %v539
        %541 = vmatprep.mubr.f32.mxu0 0.0
        %542 = vmatmul.mubr.f32.gmra.mxu0 %v278
        %v543 = vpop.f32.mrf.mxu0
        %v544 = vadd.f32 0.0, %v543
        %v545 = vpop.f32.mrf.mxu0
        %v546 = vadd.f32 0.0, %v545
        %547 = vmatprep.mubr.f32.mxu0 0.0
        %548 = vmatmul.mubr.f32.gmra.mxu0 %v279
        %v549 = vpop.f32.mrf.mxu0
        %v550 = vadd.f32 0.0, %v549
        %v551 = vpop.f32.mrf.mxu0
        %v552 = vadd.f32 0.0, %v551
        %553 = vmatprep.mubr.f32.mxu0 0.0
        %554 = vmatmul.mubr.f32.gmra.mxu0 %v280
        %v555 = vpop.f32.mrf.mxu0
        %v556 = vadd.f32 0.0, %v555
        %v557 = vpop.f32.mrf.mxu0
        %v558 = vadd.f32 0.0, %v557
        %559 = vmatprep.mubr.f32.mxu0 0.0
        %560 = vmatmul.mubr.f32.gmra.mxu0 %v281
        %v561 = vpop.f32.mrf.mxu0
        %v562 = vadd.f32 0.0, %v561
        %v563 = vpop.f32.mrf.mxu0
        %v564 = vadd.f32 0.0, %v563
        %565 = vmatprep.mubr.f32.mxu0 0.0
        %566 = vmatmul.mubr.f32.gmra.mxu0 %v282
        %v567 = vpop.f32.mrf.mxu0
        %v568 = vadd.f32 0.0, %v567
        %v569 = vpop.f32.mrf.mxu0
        %v570 = vadd.f32 0.0, %v569
        %571 = vdwg.mxu0
        %v572 = vld [vmem:[%s2] sm:$0x3]
        %v574 = vlaneseq
        %v575 = vshrl.u32 %v574, 7
        %v576 = vsub.s32 0, %v575
        %v577 = vrot.slane %v572, %v576
        %v578 = vlaneseq
        %v579 = vshrl.u32 %v578, 7
        %v580 = vsub.s32 1, %v579
        %v581 = vrot.slane %v572, %v580
        %v584 = vmul.f32 %v382, %v577
        %v585 = vmul.f32 %v384, %v581
        %v586 = vmul.f32 %v388, %v577
        %v587 = vmul.f32 %v390, %v581
        %v588 = vmul.f32 %v394, %v577
        %v589 = vmul.f32 %v396, %v581
        %v590 = vmul.f32 %v400, %v577
        %v591 = vmul.f32 %v402, %v581
        %v592 = vmul.f32 %v406, %v577
        %v593 = vmul.f32 %v408, %v581
        %v594 = vmul.f32 %v412, %v577
        %v595 = vmul.f32 %v414, %v581
        %v596 = vmul.f32 %v418, %v577
        %v597 = vmul.f32 %v420, %v581
        %v598 = vmul.f32 %v424, %v577
        %v599 = vmul.f32 %v426, %v581
        %v600 = vmul.f32 %v430, %v577
        %v601 = vmul.f32 %v432, %v581
        %v602 = vmul.f32 %v436, %v577
        %v603 = vmul.f32 %v438, %v581
        %v604 = vmul.f32 %v442, %v577
        %v605 = vmul.f32 %v444, %v581
        %v606 = vmul.f32 %v448, %v577
        %v607 = vmul.f32 %v450, %v581
        %v608 = vmul.f32 %v454, %v577
        %v609 = vmul.f32 %v456, %v581
        %v610 = vmul.f32 %v460, %v577
        %v611 = vmul.f32 %v462, %v581
        %v612 = vmul.f32 %v466, %v577
        %v613 = vmul.f32 %v468, %v581
        %v614 = vmul.f32 %v472, %v577
        %v615 = vmul.f32 %v474, %v581
        %v616 = vmul.f32 %v478, %v577
        %v617 = vmul.f32 %v480, %v581
        %v618 = vmul.f32 %v484, %v577
        %v619 = vmul.f32 %v486, %v581
        %v620 = vmul.f32 %v490, %v577
        %v621 = vmul.f32 %v492, %v581
        %v622 = vmul.f32 %v496, %v577
        %v623 = vmul.f32 %v498, %v581
        %v624 = vmul.f32 %v502, %v577
        %v625 = vmul.f32 %v504, %v581
        %v626 = vmul.f32 %v508, %v577
        %v627 = vmul.f32 %v510, %v581
        %v628 = vmul.f32 %v514, %v577
        %v629 = vmul.f32 %v516, %v581
        %v630 = vmul.f32 %v520, %v577
        %v631 = vmul.f32 %v522, %v581
        %v632 = vmul.f32 %v526, %v577
        %v633 = vmul.f32 %v528, %v581
        %v634 = vmul.f32 %v532, %v577
        %v635 = vmul.f32 %v534, %v581
        %v636 = vmul.f32 %v538, %v577
        %v637 = vmul.f32 %v540, %v581
        %v638 = vmul.f32 %v544, %v577
        %v639 = vmul.f32 %v546, %v581
        %v640 = vmul.f32 %v550, %v577
        %v641 = vmul.f32 %v552, %v581
        %v642 = vmul.f32 %v556, %v577
        %v643 = vmul.f32 %v558, %v581
        %v644 = vmul.f32 %v562, %v577
        %v645 = vmul.f32 %v564, %v581
        %v646 = vmul.f32 %v568, %v577
        %v647 = vmul.f32 %v570, %v581
        %v648 = vld [vmem:[%s3] sm:$0x3]
        %v650 = vlaneseq
        %v651 = vshrl.u32 %v650, 7
        %v652 = vsub.s32 0, %v651
        %v653 = vrot.slane %v648, %v652
        %v654 = vlaneseq
        %v655 = vshrl.u32 %v654, 7
        %v656 = vsub.s32 1, %v655
        %v657 = vrot.slane %v648, %v656
        %v660 = vadd.f32 %v584, %v653
        %v661 = vadd.f32 %v585, %v657
        %v662 = vadd.f32 %v586, %v653
        %v663 = vadd.f32 %v587, %v657
        %v664 = vadd.f32 %v588, %v653
        %v665 = vadd.f32 %v589, %v657
        %v666 = vadd.f32 %v590, %v653
        %v667 = vadd.f32 %v591, %v657
        %v668 = vadd.f32 %v592, %v653
        %v669 = vadd.f32 %v593, %v657
        %v670 = vadd.f32 %v594, %v653
        %v671 = vadd.f32 %v595, %v657
        %v672 = vadd.f32 %v596, %v653
        %v673 = vadd.f32 %v597, %v657
        %v674 = vadd.f32 %v598, %v653
        %v675 = vadd.f32 %v599, %v657
        %v676 = vadd.f32 %v600, %v653
        %v677 = vadd.f32 %v601, %v657
        %v678 = vadd.f32 %v602, %v653
        %v679 = vadd.f32 %v603, %v657
        %v680 = vadd.f32 %v604, %v653
        %v681 = vadd.f32 %v605, %v657
        %v682 = vadd.f32 %v606, %v653
        %v683 = vadd.f32 %v607, %v657
        %v684 = vadd.f32 %v608, %v653
        %v685 = vadd.f32 %v609, %v657
        %v686 = vadd.f32 %v610, %v653
        %v687 = vadd.f32 %v611, %v657
        %v688 = vadd.f32 %v612, %v653
        %v689 = vadd.f32 %v613, %v657
        %v690 = vadd.f32 %v614, %v653
        %v691 = vadd.f32 %v615, %v657
        %v692 = vadd.f32 %v616, %v653
        %v693 = vadd.f32 %v617, %v657
        %v694 = vadd.f32 %v618, %v653
        %v695 = vadd.f32 %v619, %v657
        %v696 = vadd.f32 %v620, %v653
        %v697 = vadd.f32 %v621, %v657
        %v698 = vadd.f32 %v622, %v653
        %v699 = vadd.f32 %v623, %v657
        %v700 = vadd.f32 %v624, %v653
        %v701 = vadd.f32 %v625, %v657
        %v702 = vadd.f32 %v626, %v653
        %v703 = vadd.f32 %v627, %v657
        %v704 = vadd.f32 %v628, %v653
        %v705 = vadd.f32 %v629, %v657
        %v706 = vadd.f32 %v630, %v653
        %v707 = vadd.f32 %v631, %v657
        %v708 = vadd.f32 %v632, %v653
        %v709 = vadd.f32 %v633, %v657
        %v710 = vadd.f32 %v634, %v653
        %v711 = vadd.f32 %v635, %v657
        %v712 = vadd.f32 %v636, %v653
        %v713 = vadd.f32 %v637, %v657
        %v714 = vadd.f32 %v638, %v653
        %v715 = vadd.f32 %v639, %v657
        %v716 = vadd.f32 %v640, %v653
        %v717 = vadd.f32 %v641, %v657
        %v718 = vadd.f32 %v642, %v653
        %v719 = vadd.f32 %v643, %v657
        %v720 = vadd.f32 %v644, %v653
        %v721 = vadd.f32 %v645, %v657
        %v722 = vadd.f32 %v646, %v653
        %v723 = vadd.f32 %v647, %v657
        %v724 = vxor.u32 %v660, 2147483648
        %v725 = vxor.u32 %v661, 2147483648
        %v726 = vxor.u32 %v662, 2147483648
        %v727 = vxor.u32 %v663, 2147483648
        %v728 = vxor.u32 %v664, 2147483648
        %v729 = vxor.u32 %v665, 2147483648
        %v730 = vxor.u32 %v666, 2147483648
        %v731 = vxor.u32 %v667, 2147483648
        %v732 = vxor.u32 %v668, 2147483648
        %v733 = vxor.u32 %v669, 2147483648
        %v734 = vxor.u32 %v670, 2147483648
        %v735 = vxor.u32 %v671, 2147483648
        %v736 = vxor.u32 %v672, 2147483648
        %v737 = vxor.u32 %v673, 2147483648
        %v738 = vxor.u32 %v674, 2147483648
        %v739 = vxor.u32 %v675, 2147483648
        %v740 = vxor.u32 %v676, 2147483648
        %v741 = vxor.u32 %v677, 2147483648
        %v742 = vxor.u32 %v678, 2147483648
        %v743 = vxor.u32 %v679, 2147483648
        %v744 = vxor.u32 %v680, 2147483648
        %v745 = vxor.u32 %v681, 2147483648
        %v746 = vxor.u32 %v682, 2147483648
        %v747 = vxor.u32 %v683, 2147483648
        %v748 = vxor.u32 %v684, 2147483648
        %v749 = vxor.u32 %v685, 2147483648
        %v750 = vxor.u32 %v686, 2147483648
        %v751 = vxor.u32 %v687, 2147483648
        %v752 = vxor.u32 %v688, 2147483648
        %v753 = vxor.u32 %v689, 2147483648
        %v754 = vxor.u32 %v690, 2147483648
        %v755 = vxor.u32 %v691, 2147483648
        %v756 = vxor.u32 %v692, 2147483648
        %v757 = vxor.u32 %v693, 2147483648
        %v758 = vxor.u32 %v694, 2147483648
        %v759 = vxor.u32 %v695, 2147483648
        %v760 = vxor.u32 %v696, 2147483648
        %v761 = vxor.u32 %v697, 2147483648
        %v762 = vxor.u32 %v698, 2147483648
        %v763 = vxor.u32 %v699, 2147483648
        %v764 = vxor.u32 %v700, 2147483648
        %v765 = vxor.u32 %v701, 2147483648
        %v766 = vxor.u32 %v702, 2147483648
        %v767 = vxor.u32 %v703, 2147483648
        %v768 = vxor.u32 %v704, 2147483648
        %v769 = vxor.u32 %v705, 2147483648
        %v770 = vxor.u32 %v706, 2147483648
        %v771 = vxor.u32 %v707, 2147483648
        %v772 = vxor.u32 %v708, 2147483648
        %v773 = vxor.u32 %v709, 2147483648
        %v774 = vxor.u32 %v710, 2147483648
        %v775 = vxor.u32 %v711, 2147483648
        %v776 = vxor.u32 %v712, 2147483648
        %v777 = vxor.u32 %v713, 2147483648
        %v778 = vxor.u32 %v714, 2147483648
        %v779 = vxor.u32 %v715, 2147483648
        %v780 = vxor.u32 %v716, 2147483648
        %v781 = vxor.u32 %v717, 2147483648
        %v782 = vxor.u32 %v718, 2147483648
        %v783 = vxor.u32 %v719, 2147483648
        %v784 = vxor.u32 %v720, 2147483648
        %v785 = vxor.u32 %v721, 2147483648
        %v786 = vxor.u32 %v722, 2147483648
        %v787 = vxor.u32 %v723, 2147483648
        %v788 = vmul.f32 %v724, 1.442695
        %v789 = vpow.pop %v788
        %v790 = vmul.f32 %v725, 1.442695
        %v791 = vpow.pop %v790
        %v792 = vmul.f32 %v726, 1.442695
        %v793 = vpow.pop %v792
        %v794 = vmul.f32 %v727, 1.442695
        %v795 = vpow.pop %v794
        %v796 = vmul.f32 %v728, 1.442695
        %v797 = vpow.pop %v796
        %v798 = vmul.f32 %v729, 1.442695
        %v799 = vpow.pop %v798
        %v800 = vmul.f32 %v730, 1.442695
        %v801 = vpow.pop %v800
        %v802 = vmul.f32 %v731, 1.442695
        %v803 = vpow.pop %v802
        %v804 = vmul.f32 %v732, 1.442695
        %v805 = vpow.pop %v804
        %v806 = vmul.f32 %v733, 1.442695
        %v807 = vpow.pop %v806
        %v808 = vmul.f32 %v734, 1.442695
        %v809 = vpow.pop %v808
        %v810 = vmul.f32 %v735, 1.442695
        %v811 = vpow.pop %v810
        %v812 = vmul.f32 %v736, 1.442695
        %v813 = vpow.pop %v812
        %v814 = vmul.f32 %v737, 1.442695
        %v815 = vpow.pop %v814
        %v816 = vmul.f32 %v738, 1.442695
        %v817 = vpow.pop %v816
        %v818 = vmul.f32 %v739, 1.442695
        %v819 = vpow.pop %v818
        %v820 = vmul.f32 %v740, 1.442695
        %v821 = vpow.pop %v820
        %v822 = vmul.f32 %v741, 1.442695
        %v823 = vpow.pop %v822
        %v824 = vmul.f32 %v742, 1.442695
        %v825 = vpow.pop %v824
        %v826 = vmul.f32 %v743, 1.442695
        %v827 = vpow.pop %v826
        %v828 = vmul.f32 %v744, 1.442695
        %v829 = vpow.pop %v828
        %v830 = vmul.f32 %v745, 1.442695
        %v831 = vpow.pop %v830
        %v832 = vmul.f32 %v746, 1.442695
        %v833 = vpow.pop %v832
        %v834 = vmul.f32 %v747, 1.442695
        %v835 = vpow.pop %v834
        %v836 = vmul.f32 %v748, 1.442695
        %v837 = vpow.pop %v836
        %v838 = vmul.f32 %v749, 1.442695
        %v839 = vpow.pop %v838
        %v840 = vmul.f32 %v750, 1.442695
        %v841 = vpow.pop %v840
        %v842 = vmul.f32 %v751, 1.442695
        %v843 = vpow.pop %v842
        %v844 = vmul.f32 %v752, 1.442695
        %v845 = vpow.pop %v844
        %v846 = vmul.f32 %v753, 1.442695
        %v847 = vpow.pop %v846
        %v848 = vmul.f32 %v754, 1.442695
        %v849 = vpow.pop %v848
        %v850 = vmul.f32 %v755, 1.442695
        %v851 = vpow.pop %v850
        %v852 = vmul.f32 %v756, 1.442695
        %v853 = vpow.pop %v852
        %v854 = vmul.f32 %v757, 1.442695
        %v855 = vpow.pop %v854
        %v856 = vmul.f32 %v758, 1.442695
        %v857 = vpow.pop %v856
        %v858 = vmul.f32 %v759, 1.442695
        %v859 = vpow.pop %v858
        %v860 = vmul.f32 %v760, 1.442695
        %v861 = vpow.pop %v860
        %v862 = vmul.f32 %v761, 1.442695
        %v863 = vpow.pop %v862
        %v864 = vmul.f32 %v762, 1.442695
        %v865 = vpow.pop %v864
        %v866 = vmul.f32 %v763, 1.442695
        %v867 = vpow.pop %v866
        %v868 = vmul.f32 %v764, 1.442695
        %v869 = vpow.pop %v868
        %v870 = vmul.f32 %v765, 1.442695
        %v871 = vpow.pop %v870
        %v872 = vmul.f32 %v766, 1.442695
        %v873 = vpow.pop %v872
        %v874 = vmul.f32 %v767, 1.442695
        %v875 = vpow.pop %v874
        %v876 = vmul.f32 %v768, 1.442695
        %v877 = vpow.pop %v876
        %v878 = vmul.f32 %v769, 1.442695
        %v879 = vpow.pop %v878
        %v880 = vmul.f32 %v770, 1.442695
        %v881 = vpow.pop %v880
        %v882 = vmul.f32 %v771, 1.442695
        %v883 = vpow.pop %v882
        %v884 = vmul.f32 %v772, 1.442695
        %v885 = vpow.pop %v884
        %v886 = vmul.f32 %v773, 1.442695
        %v887 = vpow.pop %v886
        %v888 = vmul.f32 %v774, 1.442695
        %v889 = vpow.pop %v888
        %v890 = vmul.f32 %v775, 1.442695
        %v891 = vpow.pop %v890
        %v892 = vmul.f32 %v776, 1.442695
        %v893 = vpow.pop %v892
        %v894 = vmul.f32 %v777, 1.442695
        %v895 = vpow.pop %v894
        %v896 = vmul.f32 %v778, 1.442695
        %v897 = vpow.pop %v896
        %v898 = vmul.f32 %v779, 1.442695
        %v899 = vpow.pop %v898
        %v900 = vmul.f32 %v780, 1.442695
        %v901 = vpow.pop %v900
        %v902 = vmul.f32 %v781, 1.442695
        %v903 = vpow.pop %v902
        %v904 = vmul.f32 %v782, 1.442695
        %v905 = vpow.pop %v904
        %v906 = vmul.f32 %v783, 1.442695
        %v907 = vpow.pop %v906
        %v908 = vmul.f32 %v784, 1.442695
        %v909 = vpow.pop %v908
        %v910 = vmul.f32 %v785, 1.442695
        %v911 = vpow.pop %v910
        %v912 = vmul.f32 %v786, 1.442695
        %v913 = vpow.pop %v912
        %v914 = vmul.f32 %v787, 1.442695
        %v915 = vpow.pop %v914
        %v916 = vadd.f32 %v789, 1.0
        %v917 = vadd.f32 %v791, 1.0
        %v918 = vadd.f32 %v793, 1.0
        %v919 = vadd.f32 %v795, 1.0
        %v920 = vadd.f32 %v797, 1.0
        %v921 = vadd.f32 %v799, 1.0
        %v922 = vadd.f32 %v801, 1.0
        %v923 = vadd.f32 %v803, 1.0
        %v924 = vadd.f32 %v805, 1.0
        %v925 = vadd.f32 %v807, 1.0
        %v926 = vadd.f32 %v809, 1.0
        %v927 = vadd.f32 %v811, 1.0
        %v928 = vadd.f32 %v813, 1.0
        %v929 = vadd.f32 %v815, 1.0
        %v930 = vadd.f32 %v817, 1.0
        %v931 = vadd.f32 %v819, 1.0
        %v932 = vadd.f32 %v821, 1.0
        %v933 = vadd.f32 %v823, 1.0
        %v934 = vadd.f32 %v825, 1.0
        %v935 = vadd.f32 %v827, 1.0
        %v936 = vadd.f32 %v829, 1.0
        %v937 = vadd.f32 %v831, 1.0
        %v938 = vadd.f32 %v833, 1.0
        %v939 = vadd.f32 %v835, 1.0
        %v940 = vadd.f32 %v837, 1.0
        %v941 = vadd.f32 %v839, 1.0
        %v942 = vadd.f32 %v841, 1.0
        %v943 = vadd.f32 %v843, 1.0
        %v944 = vadd.f32 %v845, 1.0
        %v945 = vadd.f32 %v847, 1.0
        %v946 = vadd.f32 %v849, 1.0
        %v947 = vadd.f32 %v851, 1.0
        %v948 = vadd.f32 %v853, 1.0
        %v949 = vadd.f32 %v855, 1.0
        %v950 = vadd.f32 %v857, 1.0
        %v951 = vadd.f32 %v859, 1.0
        %v952 = vadd.f32 %v861, 1.0
        %v953 = vadd.f32 %v863, 1.0
        %v954 = vadd.f32 %v865, 1.0
        %v955 = vadd.f32 %v867, 1.0
        %v956 = vadd.f32 %v869, 1.0
        %v957 = vadd.f32 %v871, 1.0
        %v958 = vadd.f32 %v873, 1.0
        %v959 = vadd.f32 %v875, 1.0
        %v960 = vadd.f32 %v877, 1.0
        %v961 = vadd.f32 %v879, 1.0
        %v962 = vadd.f32 %v881, 1.0
        %v963 = vadd.f32 %v883, 1.0
        %v964 = vadd.f32 %v885, 1.0
        %v965 = vadd.f32 %v887, 1.0
        %v966 = vadd.f32 %v889, 1.0
        %v967 = vadd.f32 %v891, 1.0
        %v968 = vadd.f32 %v893, 1.0
        %v969 = vadd.f32 %v895, 1.0
        %v970 = vadd.f32 %v897, 1.0
        %v971 = vadd.f32 %v899, 1.0
        %v972 = vadd.f32 %v901, 1.0
        %v973 = vadd.f32 %v903, 1.0
        %v974 = vadd.f32 %v905, 1.0
        %v975 = vadd.f32 %v907, 1.0
        %v976 = vadd.f32 %v909, 1.0
        %v977 = vadd.f32 %v911, 1.0
        %v978 = vadd.f32 %v913, 1.0
        %v979 = vadd.f32 %v915, 1.0
        %v980 = vrcp.pop %v916
        %v981 = vmul.f32 1.0, %v980
        %v982 = vrcp.pop %v917
        %v983 = vmul.f32 1.0, %v982
        %v984 = vrcp.pop %v918
        %v985 = vmul.f32 1.0, %v984
        %v986 = vrcp.pop %v919
        %v987 = vmul.f32 1.0, %v986
        %v988 = vrcp.pop %v920
        %v989 = vmul.f32 1.0, %v988
        %v990 = vrcp.pop %v921
        %v991 = vmul.f32 1.0, %v990
        %v992 = vrcp.pop %v922
        %v993 = vmul.f32 1.0, %v992
        %v994 = vrcp.pop %v923
        %v995 = vmul.f32 1.0, %v994
        %v996 = vrcp.pop %v924
        %v997 = vmul.f32 1.0, %v996
        %v998 = vrcp.pop %v925
        %v999 = vmul.f32 1.0, %v998
        %v1000 = vrcp.pop %v926
        %v1001 = vmul.f32 1.0, %v1000
        %v1002 = vrcp.pop %v927
        %v1003 = vmul.f32 1.0, %v1002
        %v1004 = vrcp.pop %v928
        %v1005 = vmul.f32 1.0, %v1004
        %v1006 = vrcp.pop %v929
        %v1007 = vmul.f32 1.0, %v1006
        %v1008 = vrcp.pop %v930
        %v1009 = vmul.f32 1.0, %v1008
        %v1010 = vrcp.pop %v931
        %v1011 = vmul.f32 1.0, %v1010
        %v1012 = vrcp.pop %v932
        %v1013 = vmul.f32 1.0, %v1012
        %v1014 = vrcp.pop %v933
        %v1015 = vmul.f32 1.0, %v1014
        %v1016 = vrcp.pop %v934
        %v1017 = vmul.f32 1.0, %v1016
        %v1018 = vrcp.pop %v935
        %v1019 = vmul.f32 1.0, %v1018
        %v1020 = vrcp.pop %v936
        %v1021 = vmul.f32 1.0, %v1020
        %v1022 = vrcp.pop %v937
        %v1023 = vmul.f32 1.0, %v1022
        %v1024 = vrcp.pop %v938
        %v1025 = vmul.f32 1.0, %v1024
        %v1026 = vrcp.pop %v939
        %v1027 = vmul.f32 1.0, %v1026
        %v1028 = vrcp.pop %v940
        %v1029 = vmul.f32 1.0, %v1028
        %v1030 = vrcp.pop %v941
        %v1031 = vmul.f32 1.0, %v1030
        %v1032 = vrcp.pop %v942
        %v1033 = vmul.f32 1.0, %v1032
        %v1034 = vrcp.pop %v943
        %v1035 = vmul.f32 1.0, %v1034
        %v1036 = vrcp.pop %v944
        %v1037 = vmul.f32 1.0, %v1036
        %v1038 = vrcp.pop %v945
        %v1039 = vmul.f32 1.0, %v1038
        %v1040 = vrcp.pop %v946
        %v1041 = vmul.f32 1.0, %v1040
        %v1042 = vrcp.pop %v947
        %v1043 = vmul.f32 1.0, %v1042
        %v1044 = vrcp.pop %v948
        %v1045 = vmul.f32 1.0, %v1044
        %v1046 = vrcp.pop %v949
        %v1047 = vmul.f32 1.0, %v1046
        %v1048 = vrcp.pop %v950
        %v1049 = vmul.f32 1.0, %v1048
        %v1050 = vrcp.pop %v951
        %v1051 = vmul.f32 1.0, %v1050
        %v1052 = vrcp.pop %v952
        %v1053 = vmul.f32 1.0, %v1052
        %v1054 = vrcp.pop %v953
        %v1055 = vmul.f32 1.0, %v1054
        %v1056 = vrcp.pop %v954
        %v1057 = vmul.f32 1.0, %v1056
        %v1058 = vrcp.pop %v955
        %v1059 = vmul.f32 1.0, %v1058
        %v1060 = vrcp.pop %v956
        %v1061 = vmul.f32 1.0, %v1060
        %v1062 = vrcp.pop %v957
        %v1063 = vmul.f32 1.0, %v1062
        %v1064 = vrcp.pop %v958
        %v1065 = vmul.f32 1.0, %v1064
        %v1066 = vrcp.pop %v959
        %v1067 = vmul.f32 1.0, %v1066
        %v1068 = vrcp.pop %v960
        %v1069 = vmul.f32 1.0, %v1068
        %v1070 = vrcp.pop %v961
        %v1071 = vmul.f32 1.0, %v1070
        %v1072 = vrcp.pop %v962
        %v1073 = vmul.f32 1.0, %v1072
        %v1074 = vrcp.pop %v963
        %v1075 = vmul.f32 1.0, %v1074
        %v1076 = vrcp.pop %v964
        %v1077 = vmul.f32 1.0, %v1076
        %v1078 = vrcp.pop %v965
        %v1079 = vmul.f32 1.0, %v1078
        %v1080 = vrcp.pop %v966
        %v1081 = vmul.f32 1.0, %v1080
        %v1082 = vrcp.pop %v967
        %v1083 = vmul.f32 1.0, %v1082
        %v1084 = vrcp.pop %v968
        %v1085 = vmul.f32 1.0, %v1084
        %v1086 = vrcp.pop %v969
        %v1087 = vmul.f32 1.0, %v1086
        %v1088 = vrcp.pop %v970
        %v1089 = vmul.f32 1.0, %v1088
        %v1090 = vrcp.pop %v971
        %v1091 = vmul.f32 1.0, %v1090
        %v1092 = vrcp.pop %v972
        %v1093 = vmul.f32 1.0, %v1092
        %v1094 = vrcp.pop %v973
        %v1095 = vmul.f32 1.0, %v1094
        %v1096 = vrcp.pop %v974
        %v1097 = vmul.f32 1.0, %v1096
        %v1098 = vrcp.pop %v975
        %v1099 = vmul.f32 1.0, %v1098
        %v1100 = vrcp.pop %v976
        %v1101 = vmul.f32 1.0, %v1100
        %v1102 = vrcp.pop %v977
        %v1103 = vmul.f32 1.0, %v1102
        %v1104 = vrcp.pop %v978
        %v1105 = vmul.f32 1.0, %v1104
        %v1106 = vrcp.pop %v979
        %v1107 = vmul.f32 1.0, %v1106
        %v1108 = vmul.f32 %v660, %v981
        %v1109 = vmul.f32 %v661, %v983
        %v1110 = vmul.f32 %v662, %v985
        %v1111 = vmul.f32 %v663, %v987
        %v1112 = vmul.f32 %v664, %v989
        %v1113 = vmul.f32 %v665, %v991
        %v1114 = vmul.f32 %v666, %v993
        %v1115 = vmul.f32 %v667, %v995
        %v1116 = vmul.f32 %v668, %v997
        %v1117 = vmul.f32 %v669, %v999
        %v1118 = vmul.f32 %v670, %v1001
        %v1119 = vmul.f32 %v671, %v1003
        %v1120 = vmul.f32 %v672, %v1005
        %v1121 = vmul.f32 %v673, %v1007
        %v1122 = vmul.f32 %v674, %v1009
        %v1123 = vmul.f32 %v675, %v1011
        %v1124 = vmul.f32 %v676, %v1013
        %v1125 = vmul.f32 %v677, %v1015
        %v1126 = vmul.f32 %v678, %v1017
        %v1127 = vmul.f32 %v679, %v1019
        %v1128 = vmul.f32 %v680, %v1021
        %v1129 = vmul.f32 %v681, %v1023
        %v1130 = vmul.f32 %v682, %v1025
        %v1131 = vmul.f32 %v683, %v1027
        %v1132 = vmul.f32 %v684, %v1029
        %v1133 = vmul.f32 %v685, %v1031
        %v1134 = vmul.f32 %v686, %v1033
        %v1135 = vmul.f32 %v687, %v1035
        %v1136 = vmul.f32 %v688, %v1037
        %v1137 = vmul.f32 %v689, %v1039
        %v1138 = vmul.f32 %v690, %v1041
        %v1139 = vmul.f32 %v691, %v1043
        %v1140 = vmul.f32 %v692, %v1045
        %v1141 = vmul.f32 %v693, %v1047
        %v1142 = vmul.f32 %v694, %v1049
        %v1143 = vmul.f32 %v695, %v1051
        %v1144 = vmul.f32 %v696, %v1053
        %v1145 = vmul.f32 %v697, %v1055
        %v1146 = vmul.f32 %v698, %v1057
        %v1147 = vmul.f32 %v699, %v1059
        %v1148 = vmul.f32 %v700, %v1061
        %v1149 = vmul.f32 %v701, %v1063
        %v1150 = vmul.f32 %v702, %v1065
        %v1151 = vmul.f32 %v703, %v1067
        %v1152 = vmul.f32 %v704, %v1069
        %v1153 = vmul.f32 %v705, %v1071
        %v1154 = vmul.f32 %v706, %v1073
        %v1155 = vmul.f32 %v707, %v1075
        %v1156 = vmul.f32 %v708, %v1077
        %v1157 = vmul.f32 %v709, %v1079
        %v1158 = vmul.f32 %v710, %v1081
        %v1159 = vmul.f32 %v711, %v1083
        %v1160 = vmul.f32 %v712, %v1085
        %v1161 = vmul.f32 %v713, %v1087
        %v1162 = vmul.f32 %v714, %v1089
        %v1163 = vmul.f32 %v715, %v1091
        %v1164 = vmul.f32 %v716, %v1093
        %v1165 = vmul.f32 %v717, %v1095
        %v1166 = vmul.f32 %v718, %v1097
        %v1167 = vmul.f32 %v719, %v1099
        %v1168 = vmul.f32 %v720, %v1101
        %v1169 = vmul.f32 %v721, %v1103
        %v1170 = vmul.f32 %v722, %v1105
        %v1171 = vmul.f32 %v723, %v1107
        %1172 = vst [vmem:[%s248] sm:$0xff] %v1108
        %1173 = vst [vmem:[%s248 + $0x8] sm:$0xff] %v1109
        %1174 = vst [vmem:[%s248 + $0x10] sm:$0xff] %v1110
        %1175 = vst [vmem:[%s248 + $0x18] sm:$0xff] %v1111
        %1176 = vst [vmem:[%s248 + $0x20] sm:$0xff] %v1112
        %1177 = vst [vmem:[%s248 + $0x28] sm:$0xff] %v1113
        %1178 = vst [vmem:[%s248 + $0x30] sm:$0xff] %v1114
        %1179 = vst [vmem:[%s248 + $0x38] sm:$0xff] %v1115
        %1180 = vst [vmem:[%s248 + $0x40] sm:$0xff] %v1116
        %1181 = vst [vmem:[%s248 + $0x48] sm:$0xff] %v1117
        %1182 = vst [vmem:[%s248 + $0x50] sm:$0xff] %v1118
        %1183 = vst [vmem:[%s248 + $0x58] sm:$0xff] %v1119
        %1184 = vst [vmem:[%s248 + $0x60] sm:$0xff] %v1120
        %1185 = vst [vmem:[%s248 + $0x68] sm:$0xff] %v1121
        %1186 = vst [vmem:[%s248 + $0x70] sm:$0xff] %v1122
        %1187 = vst [vmem:[%s248 + $0x78] sm:$0xff] %v1123
        %1188 = vst [vmem:[%s248 + $0x80] sm:$0xff] %v1124
        %1189 = vst [vmem:[%s248 + $0x88] sm:$0xff] %v1125
        %1190 = vst [vmem:[%s248 + $0x90] sm:$0xff] %v1126
        %1191 = vst [vmem:[%s248 + $0x98] sm:$0xff] %v1127
        %1192 = vst [vmem:[%s248 + $0xa0] sm:$0xff] %v1128
        %1193 = vst [vmem:[%s248 + $0xa8] sm:$0xff] %v1129
        %1194 = vst [vmem:[%s248 + $0xb0] sm:$0xff] %v1130
        %1195 = vst [vmem:[%s248 + $0xb8] sm:$0xff] %v1131
        %1196 = vst [vmem:[%s248 + $0xc0] sm:$0xff] %v1132
        %1197 = vst [vmem:[%s248 + $0xc8] sm:$0xff] %v1133
        %1198 = vst [vmem:[%s248 + $0xd0] sm:$0xff] %v1134
        %1199 = vst [vmem:[%s248 + $0xd8] sm:$0xff] %v1135
        %1200 = vst [vmem:[%s248 + $0xe0] sm:$0xff] %v1136
        %1201 = vst [vmem:[%s248 + $0xe8] sm:$0xff] %v1137
        %1202 = vst [vmem:[%s248 + $0xf0] sm:$0xff] %v1138
        %1203 = vst [vmem:[%s248 + $0xf8] sm:$0xff] %v1139
        %1204 = vst [vmem:[%s248 + $0x100] sm:$0xff] %v1140
        %1205 = vst [vmem:[%s248 + $0x108] sm:$0xff] %v1141
        %1206 = vst [vmem:[%s248 + $0x110] sm:$0xff] %v1142
        %1207 = vst [vmem:[%s248 + $0x118] sm:$0xff] %v1143
        %1208 = vst [vmem:[%s248 + $0x120] sm:$0xff] %v1144
        %1209 = vst [vmem:[%s248 + $0x128] sm:$0xff] %v1145
        %1210 = vst [vmem:[%s248 + $0x130] sm:$0xff] %v1146
        %1211 = vst [vmem:[%s248 + $0x138] sm:$0xff] %v1147
        %1212 = vst [vmem:[%s248 + $0x140] sm:$0xff] %v1148
        %1213 = vst [vmem:[%s248 + $0x148] sm:$0xff] %v1149
        %1214 = vst [vmem:[%s248 + $0x150] sm:$0xff] %v1150
        %1215 = vst [vmem:[%s248 + $0x158] sm:$0xff] %v1151
        %1216 = vst [vmem:[%s248 + $0x160] sm:$0xff] %v1152
        %1217 = vst [vmem:[%s248 + $0x168] sm:$0xff] %v1153
        %1218 = vst [vmem:[%s248 + $0x170] sm:$0xff] %v1154
        %1219 = vst [vmem:[%s248 + $0x178] sm:$0xff] %v1155
        %1220 = vst [vmem:[%s248 + $0x180] sm:$0xff] %v1156
        %1221 = vst [vmem:[%s248 + $0x188] sm:$0xff] %v1157
        %1222 = vst [vmem:[%s248 + $0x190] sm:$0xff] %v1158
        %1223 = vst [vmem:[%s248 + $0x198] sm:$0xff] %v1159
        %1224 = vst [vmem:[%s248 + $0x1a0] sm:$0xff] %v1160
        %1225 = vst [vmem:[%s248 + $0x1a8] sm:$0xff] %v1161
        %1226 = vst [vmem:[%s248 + $0x1b0] sm:$0xff] %v1162
        %1227 = vst [vmem:[%s248 + $0x1b8] sm:$0xff] %v1163
        %1228 = vst [vmem:[%s248 + $0x1c0] sm:$0xff] %v1164
        %1229 = vst [vmem:[%s248 + $0x1c8] sm:$0xff] %v1165
        %1230 = vst [vmem:[%s248 + $0x1d0] sm:$0xff] %v1166
        %1231 = vst [vmem:[%s248 + $0x1d8] sm:$0xff] %v1167
        %1232 = vst [vmem:[%s248 + $0x1e0] sm:$0xff] %v1168
        %1233 = vst [vmem:[%s248 + $0x1e8] sm:$0xff] %v1169
        %1234 = vst [vmem:[%s248 + $0x1f0] sm:$0xff] %v1170
        %1235 = vst [vmem:[%s248 + $0x1f8] sm:$0xff] %v1171
        %s1236 = sand.u32 %s135, 1
        %s1237 = scalar_lea.sflag [#allocation4], %s1236
        %s1238 = sand.u32 %s135, 1
        %s1239 = smul.addr %s1238, 512
        %s1240 = scalar_lea.vmem [#allocation7], %s1239
        // Predicated region
        $region45: #{tpu_custom_call.1} parent=35 // pred_check
          %p1241 = pneg %p145
        $region46: #{tpu_custom_call.1} parent=35 // pred_check_branch
          %1243 = sbr.rel (%p1241) target = $region48
        $region47: #{tpu_custom_call.1} parent=35 // pred_region
          %s1244 = smul.u32 32, %s27
          %s1246 = ssub.s32 8192, 8192
          %1247 = vsyncadd %s1237, %s1246
          %s1248 = smul.addr %s1244, 2
          %s1249 = smul.addr %s26, 64
          %s1250 = sadd.s32 %s1248, %s1249
          %s1251 = smul.addr %s1250, 128
          %s1252 = scalar_lea.hbm %s4, %s1251
          %s1253 = sshll.u32 %s1240, 4
          %s1254 = int_to_ptr.vmem [resolvable:$true] %s1253
          %1259 = dma.vmem_to_hbm [thread:$0]  %s1254, 8192, %s1252, %s1237, 256, 256, 16
        $region48: #{tpu_custom_call.1} parent=35 // pred_fallthru
          _
      $region36: #{tpu_custom_call.1} parent=5 // pred_fallthru
        _
      %p1260 = scmp.le.s32.totalorder 2, %s17
      // Predicated region
      $region49: #{tpu_custom_call.1} parent=5 // pred_check
        %p1261 = pneg %p1260
      $region50: #{tpu_custom_call.1} parent=5 // pred_check_branch
        %1263 = sbr.rel (%p1261) target = $region52
      $region51: #{tpu_custom_call.1} parent=5 // pred_region
        %s1264 = ssub.s32 %s17, 2
        // Predicated region
        $region53: #{tpu_custom_call.1} parent=51 // pred_check
          %p1265 = pneg %p151
        $region54: #{tpu_custom_call.1} parent=51 // pred_check_branch
          %1267 = sbr.rel (%p1265) target = $region56
        $region55: #{tpu_custom_call.1} parent=51 // pred_region
          %s1268 = sand.u32 %s136, 1
          %s1269 = scalar_lea.sflag [#allocation4], %s1268
          %s1270 = sand.u32 %s136, 1
          %s1271 = smul.addr %s1270, 512
          %s1272 = scalar_lea.vmem [#allocation7], %s1271
          %1273 = dma.done %s1269, 8192
        $region56: #{tpu_custom_call.1} parent=51 // pred_fallthru
          _
      $region52: #{tpu_custom_call.1} parent=5 // pred_fallthru
        _
    $region6: #{tpu_custom_call.1} parent=1 // loop_footer
      %s21 = sadd.s32 1, %s17
    $region7: #{tpu_custom_call.1} parent=1 // loop_footer_branch
      %16 = sbr.rel target = $region3
    $region8: #{tpu_custom_call.1} parent=1 // loop_exit
      _
    %1274 = vsyncpa [#allocation3], 1
    %s1275 = scalar_lea.sflag [#allocation3], 1
    %1276 = vsyncpa %s1275, 1
    %1277 = vsyncpa [#allocation6], 1
    %1278 = vsyncpa [#allocation4], 1
    %s1279 = scalar_lea.sflag [#allocation4], 1
    %1280 = vsyncpa %s1279, 1

</llo_original>
